<compile_context>
chip_gen: v6e
topology: v6e:2x2x1
jax: 0.10.0
libtpu: 0.0.40
codegen_flags: <defaults>
</compile_context>

<pallas_src>
import jax
import jax.numpy as jnp
from jax import lax
from jax.experimental import pallas as pl
from jax.experimental.pallas import tpu as pltpu

# ---- model hyperparameters (from GM.py) -------------------------------------
L0_IN_CH, L0_OUT_CH = 8, 16
L0_HK, L0_WK = 3, 3
L2_IN, L2_OUT = 576, 32
H_IN = W_IN = 8                                     # implied by 576 = 16*6*6
H_OUT, W_OUT = H_IN - L0_HK + 1, W_IN - L0_WK + 1   # 6, 6
NPATCH = H_OUT * W_OUT                              # 36 spatial outputs
KVOL = L0_IN_CH * L0_HK * L0_WK                     # 72 = im2col depth
G = W_OUT                                           # group = one conv output row
NG = NPATCH // G                                    # 6 groups
KG = G * KVOL                                       # 432 = grouped im2col depth
CG = G * L0_OUT_CH                                  # 96  = grouped conv width
MAX_TB = 32                                         # batch tile cap (8-aligned)


# ---- Pallas kernel -----------------------------------------------------------
def dnn_kernel(pg_ref, wcg_ref, wlg_ref, out_ref):
    # pg_ref : (NG, TB, KG)      bf16  grouped im2col rows (group = output row)
    # wcg_ref: (KG, CG)          bf16  block-diag of 6 copies of conv weight^T
    # wlg_ref: (NG, CG, L2_OUT)  bf16  linear weight, rows permuted to match
    #                                  the conv-group column order (folds in
    #                                  PyTorch's (c, h, w) flatten order)
    # out_ref: (TB, L2_OUT)      f32
    wcg = wcg_ref[...]
    acc = jnp.zeros(out_ref.shape, jnp.float32)
    for g in range(NG):                               # static unroll: 6 groups
        conv_g = jnp.dot(pg_ref[g], wcg,
                         preferred_element_type=jnp.float32)      # (TB, CG) f32
        act_g = jnp.maximum(conv_g, 0.0).astype(jnp.bfloat16)     # ReLU (VPU)
        acc = acc + jnp.dot(act_g, wlg_ref[g],
                            preferred_element_type=jnp.float32)   # (TB, 32) f32
    out_ref[...] = acc


# ---- glue: grouped im2col + weight packing (plain JAX, tiny) -----------------
def _im2col_grouped(x):
    # x: (B, C, 8, 8) NCHW -> (NG, B, KG)
    # pg[g, b, ow*KVOL + (ic*9 + kh*3 + kw)] = x[b, ic, g + kh, ow + kw]
    cols = []
    for kh in range(L0_HK):
        for kw in range(L0_WK):
            cols.append(x[:, :, kh:kh + H_OUT, kw:kw + W_OUT])    # (B, C, 6, 6)
    p = jnp.stack(cols, axis=2)                                   # (B, C, 9, 6, 6)
    p = p.transpose(3, 0, 4, 1, 2)                                # (oh, B, ow, C, 9)
    return p.reshape(NG, x.shape[0], KG)                          # (6, B, 432)


def _pack_weights(w_conv, w_lin):
    # Grouped conv weight: block-diagonal of G copies of Wconv^T -> (432, 96).
    wc_t = w_conv.reshape(L0_OUT_CH, KVOL).astype(jnp.float32).T          # (72, 16)
    eye_g = jnp.eye(G, dtype=jnp.float32)                                 # (6, 6)
    wcg = jnp.einsum('rq,jc->rjqc', eye_g, wc_t).reshape(KG, CG)          # (432, 96)
    wcg = wcg.astype(jnp.bfloat16)
    # Linear weight permuted so row (g, ow*16 + c) matches the conv-group
    # column order; wl[s, c, o] = Wlin[o, c*36 + s] (PyTorch flatten order).
    wl = w_lin.astype(jnp.float32).reshape(L2_OUT, L0_OUT_CH, NPATCH)
    wl = wl.transpose(2, 1, 0)                                            # (36, 16, 32)
    wlg = wl.reshape(NG, CG, L2_OUT).astype(jnp.bfloat16)                 # (6, 96, 32)
    return wcg, wlg


@jax.jit
def dnn_forward_batched(x_nchw, w_conv, w_lin):
    """x_nchw: (B, 8, 8, 8) NCHW; returns (B, 32) — per-sample DNN.forward."""
    B = x_nchw.shape[0]
    TB = MAX_TB if B > MAX_TB else max(8, -(-B // 8) * 8)
    b_pad = -(-B // TB) * TB

    x = x_nchw.astype(jnp.float32)
    if b_pad != B:
        x = jnp.pad(x, ((0, b_pad - B), (0, 0), (0, 0), (0, 0)))
    pg = _im2col_grouped(x).astype(jnp.bfloat16)                          # (6, b_pad, 432)
    wcg, wlg = _pack_weights(w_conv, w_lin)

    flops = 2 * b_pad * (NG * KG * CG + NG * CG * L2_OUT)
    bytes_accessed = 2 * (pg.size + wcg.size + wlg.size) + 4 * b_pad * L2_OUT

    out = pl.pallas_call(
        dnn_kernel,
        out_shape=jax.ShapeDtypeStruct((b_pad, L2_OUT), jnp.float32),
        grid=(b_pad // TB,),
        in_specs=[
            pl.BlockSpec((NG, TB, KG), lambda i: (0, i, 0)),       # per-tile patches
            pl.BlockSpec((KG, CG), lambda i: (0, 0)),              # resident conv weight
            pl.BlockSpec((NG, CG, L2_OUT), lambda i: (0, 0, 0)),   # resident linear weight
        ],
        out_specs=pl.BlockSpec((TB, L2_OUT), lambda i: (i, 0)),
        compiler_params=pltpu.CompilerParams(
            dimension_semantics=("parallel",)),
        cost_estimate=pl.CostEstimate(flops=flops, transcendentals=0,
                                      bytes_accessed=bytes_accessed),
    )(pg, wcg, wlg)
    return out[:B]


def dnn_forward(x_nchw, w_conv, w_lin):
    """Exact module semantics: x (1, 8, 8, 8) -> (32,)."""
    return dnn_forward_batched(x_nchw, w_conv, w_lin)[0]


# ---- pure-JAX reference for a correctness check ------------------------------
def dnn_reference_single(x_chw, w_conv, w_lin):
    y = lax.conv_general_dilated(
        x_chw[None].astype(jnp.float32), w_conv.astype(jnp.float32),
        window_strides=(1, 1), padding="VALID",
        dimension_numbers=("NCHW", "OIHW", "NCHW"))
    y = jnp.maximum(y, 0.0).reshape(-1)          # (576,), order (c, h, w)
    return w_lin.astype(jnp.float32) @ y         # (32,)


def dnn_reference_batched(x, w_conv, w_lin):
    return jax.vmap(dnn_reference_single, in_axes=(0, None, None))(x, w_conv, w_lin)


if __name__ == "__main__":
    key = jax.random.PRNGKey(0)
    kx, kc, kl = jax.random.split(key, 3)

    B = 20                                                   # exercises batch padding
    x = jax.random.normal(kx, (B, L0_IN_CH, H_IN, W_IN), dtype=jnp.float32)
    bc = 1.0 / (KVOL ** 0.5)
    w_conv = jax.random.uniform(kc, (L0_OUT_CH, L0_IN_CH, L0_HK, L0_WK),
                                minval=-bc, maxval=bc, dtype=jnp.float32)
    bl = 1.0 / (L2_IN ** 0.5)
    w_lin = jax.random.uniform(kl, (L2_OUT, L2_IN),
                               minval=-bl, maxval=bl, dtype=jnp.float32)

    # Batched path (amortizes pallas_call / weight DMA over B samples).
    y_b = dnn_forward_batched(x, w_conv, w_lin)
    jax.block_until_ready(y_b)
    y_ref_b = dnn_reference_batched(x, w_conv, w_lin)
    assert y_b.shape == (B, L2_OUT) and y_b.dtype == jnp.float32
    assert jnp.allclose(y_b, y_ref_b, atol=2e-2, rtol=2e-2), (y_b, y_ref_b)

    # Single-sample path (exact module semantics: (1, 8, 8, 8) -> (32,)).
    y1 = dnn_forward(x[:1], w_conv, w_lin)
    jax.block_until_ready(y1)
    y1_ref = dnn_reference_single(x[0], w_conv, w_lin)
    assert y1.shape == (L2_OUT,)
    assert jnp.allclose(y1, y1_ref, atol=2e-2, rtol=2e-2), (y1, y1_ref)

    print("KERNEL_OK")
</pallas_src>

<mosaic_0001>
module attributes {stable_mosaic.version = 11 : i64} {
  func.func @dnn_kernel(%arg0: i32, %arg1: memref<6x24x432xbf16, #tpu.memory_space<vmem>>, %arg2: memref<432x96xbf16, #tpu.memory_space<vmem>>, %arg3: memref<6x96x32xbf16, #tpu.memory_space<vmem>>, %arg4: memref<24x32xf32, #tpu.memory_space<vmem>>) attributes {dimension_semantics = [#tpu.dimension_semantics<parallel>], iteration_bounds = array<i64: 1>, scalar_prefetch = 0 : i64, scratch_operands = 0 : i64, tpu.core_type = #tpu.core_type<tc>, window_params = [{transform_indices = @transform_0, window_bounds = array<i64: 6, 24, 432>}, {pipeline_mode = #tpu.pipeline_mode<synchronous>, transform_indices = @transform_1, window_bounds = array<i64: 432, 96>}, {pipeline_mode = #tpu.pipeline_mode<synchronous>, transform_indices = @transform_2, window_bounds = array<i64: 6, 96, 32>}, {transform_indices = @transform_3, window_bounds = array<i64: 24, 32>}]} {
    %c0 = arith.constant 0 : index
    %c0_0 = arith.constant 0 : index
    %0 = vector.load %arg2[%c0, %c0_0] : memref<432x96xbf16, #tpu.memory_space<vmem>>, vector<432x96xbf16>
    %cst = arith.constant 0.000000e+00 : f32
    %1 = vector.broadcast %cst : f32 to vector<24x32xf32>
    %c0_1 = arith.constant 0 : index
    %c0_2 = arith.constant 0 : index
    %c0_3 = arith.constant 0 : index
    %2 = vector.load %arg1[%c0_1, %c0_2, %c0_3] : memref<6x24x432xbf16, #tpu.memory_space<vmem>>, vector<1x24x432xbf16>
    %3 = vector.shape_cast %2 : vector<1x24x432xbf16> to vector<24x432xbf16>
    %cst_4 = arith.constant dense<0.000000e+00> : vector<24x96xf32>
    %4 = tpu.matmul %3, %0, %cst_4 {dimension_numbers = #tpu.dot_dimension_numbers<[1], [0], [0], [1], [0, 0, 1, 1], [], []>} : vector<24x432xbf16>, vector<432x96xbf16>, vector<24x96xf32> -> vector<24x96xf32>
    %cst_5 = arith.constant 0.000000e+00 : f32
    %5 = vector.broadcast %cst_5 : f32 to vector<24x96xf32>
    %6 = arith.maximumf %4, %5 : vector<24x96xf32>
    %7 = arith.truncf %6 : vector<24x96xf32> to vector<24x96xbf16>
    %c0_6 = arith.constant 0 : index
    %c0_7 = arith.constant 0 : index
    %c0_8 = arith.constant 0 : index
    %8 = vector.load %arg3[%c0_6, %c0_7, %c0_8] : memref<6x96x32xbf16, #tpu.memory_space<vmem>>, vector<1x96x32xbf16>
    %9 = vector.shape_cast %8 : vector<1x96x32xbf16> to vector<96x32xbf16>
    %cst_9 = arith.constant dense<0.000000e+00> : vector<24x32xf32>
    %10 = tpu.matmul %7, %9, %cst_9 {dimension_numbers = #tpu.dot_dimension_numbers<[1], [0], [0], [1], [0, 0, 1, 1], [], []>} : vector<24x96xbf16>, vector<96x32xbf16>, vector<24x32xf32> -> vector<24x32xf32>
    %11 = arith.addf %1, %10 : vector<24x32xf32>
    %c1 = arith.constant 1 : index
    %c0_10 = arith.constant 0 : index
    %c0_11 = arith.constant 0 : index
    %12 = vector.load %arg1[%c1, %c0_10, %c0_11] : memref<6x24x432xbf16, #tpu.memory_space<vmem>>, vector<1x24x432xbf16>
    %13 = vector.shape_cast %12 : vector<1x24x432xbf16> to vector<24x432xbf16>
    %cst_12 = arith.constant dense<0.000000e+00> : vector<24x96xf32>
    %14 = tpu.matmul %13, %0, %cst_12 {dimension_numbers = #tpu.dot_dimension_numbers<[1], [0], [0], [1], [0, 0, 1, 1], [], []>} : vector<24x432xbf16>, vector<432x96xbf16>, vector<24x96xf32> -> vector<24x96xf32>
    %cst_13 = arith.constant 0.000000e+00 : f32
    %15 = vector.broadcast %cst_13 : f32 to vector<24x96xf32>
    %16 = arith.maximumf %14, %15 : vector<24x96xf32>
    %17 = arith.truncf %16 : vector<24x96xf32> to vector<24x96xbf16>
    %c1_14 = arith.constant 1 : index
    %c0_15 = arith.constant 0 : index
    %c0_16 = arith.constant 0 : index
    %18 = vector.load %arg3[%c1_14, %c0_15, %c0_16] : memref<6x96x32xbf16, #tpu.memory_space<vmem>>, vector<1x96x32xbf16>
    %19 = vector.shape_cast %18 : vector<1x96x32xbf16> to vector<96x32xbf16>
    %cst_17 = arith.constant dense<0.000000e+00> : vector<24x32xf32>
    %20 = tpu.matmul %17, %19, %cst_17 {dimension_numbers = #tpu.dot_dimension_numbers<[1], [0], [0], [1], [0, 0, 1, 1], [], []>} : vector<24x96xbf16>, vector<96x32xbf16>, vector<24x32xf32> -> vector<24x32xf32>
    %21 = arith.addf %11, %20 : vector<24x32xf32>
    %c2 = arith.constant 2 : index
    %c0_18 = arith.constant 0 : index
    %c0_19 = arith.constant 0 : index
    %22 = vector.load %arg1[%c2, %c0_18, %c0_19] : memref<6x24x432xbf16, #tpu.memory_space<vmem>>, vector<1x24x432xbf16>
    %23 = vector.shape_cast %22 : vector<1x24x432xbf16> to vector<24x432xbf16>
    %cst_20 = arith.constant dense<0.000000e+00> : vector<24x96xf32>
    %24 = tpu.matmul %23, %0, %cst_20 {dimension_numbers = #tpu.dot_dimension_numbers<[1], [0], [0], [1], [0, 0, 1, 1], [], []>} : vector<24x432xbf16>, vector<432x96xbf16>, vector<24x96xf32> -> vector<24x96xf32>
    %cst_21 = arith.constant 0.000000e+00 : f32
    %25 = vector.broadcast %cst_21 : f32 to vector<24x96xf32>
    %26 = arith.maximumf %24, %25 : vector<24x96xf32>
    %27 = arith.truncf %26 : vector<24x96xf32> to vector<24x96xbf16>
    %c2_22 = arith.constant 2 : index
    %c0_23 = arith.constant 0 : index
    %c0_24 = arith.constant 0 : index
    %28 = vector.load %arg3[%c2_22, %c0_23, %c0_24] : memref<6x96x32xbf16, #tpu.memory_space<vmem>>, vector<1x96x32xbf16>
    %29 = vector.shape_cast %28 : vector<1x96x32xbf16> to vector<96x32xbf16>
    %cst_25 = arith.constant dense<0.000000e+00> : vector<24x32xf32>
    %30 = tpu.matmul %27, %29, %cst_25 {dimension_numbers = #tpu.dot_dimension_numbers<[1], [0], [0], [1], [0, 0, 1, 1], [], []>} : vector<24x96xbf16>, vector<96x32xbf16>, vector<24x32xf32> -> vector<24x32xf32>
    %31 = arith.addf %21, %30 : vector<24x32xf32>
    %c3 = arith.constant 3 : index
    %c0_26 = arith.constant 0 : index
    %c0_27 = arith.constant 0 : index
    %32 = vector.load %arg1[%c3, %c0_26, %c0_27] : memref<6x24x432xbf16, #tpu.memory_space<vmem>>, vector<1x24x432xbf16>
    %33 = vector.shape_cast %32 : vector<1x24x432xbf16> to vector<24x432xbf16>
    %cst_28 = arith.constant dense<0.000000e+00> : vector<24x96xf32>
    %34 = tpu.matmul %33, %0, %cst_28 {dimension_numbers = #tpu.dot_dimension_numbers<[1], [0], [0], [1], [0, 0, 1, 1], [], []>} : vector<24x432xbf16>, vector<432x96xbf16>, vector<24x96xf32> -> vector<24x96xf32>
    %cst_29 = arith.constant 0.000000e+00 : f32
    %35 = vector.broadcast %cst_29 : f32 to vector<24x96xf32>
    %36 = arith.maximumf %34, %35 : vector<24x96xf32>
    %37 = arith.truncf %36 : vector<24x96xf32> to vector<24x96xbf16>
    %c3_30 = arith.constant 3 : index
    %c0_31 = arith.constant 0 : index
    %c0_32 = arith.constant 0 : index
    %38 = vector.load %arg3[%c3_30, %c0_31, %c0_32] : memref<6x96x32xbf16, #tpu.memory_space<vmem>>, vector<1x96x32xbf16>
    %39 = vector.shape_cast %38 : vector<1x96x32xbf16> to vector<96x32xbf16>
    %cst_33 = arith.constant dense<0.000000e+00> : vector<24x32xf32>
    %40 = tpu.matmul %37, %39, %cst_33 {dimension_numbers = #tpu.dot_dimension_numbers<[1], [0], [0], [1], [0, 0, 1, 1], [], []>} : vector<24x96xbf16>, vector<96x32xbf16>, vector<24x32xf32> -> vector<24x32xf32>
    %41 = arith.addf %31, %40 : vector<24x32xf32>
    %c4 = arith.constant 4 : index
    %c0_34 = arith.constant 0 : index
    %c0_35 = arith.constant 0 : index
    %42 = vector.load %arg1[%c4, %c0_34, %c0_35] : memref<6x24x432xbf16, #tpu.memory_space<vmem>>, vector<1x24x432xbf16>
    %43 = vector.shape_cast %42 : vector<1x24x432xbf16> to vector<24x432xbf16>
    %cst_36 = arith.constant dense<0.000000e+00> : vector<24x96xf32>
    %44 = tpu.matmul %43, %0, %cst_36 {dimension_numbers = #tpu.dot_dimension_numbers<[1], [0], [0], [1], [0, 0, 1, 1], [], []>} : vector<24x432xbf16>, vector<432x96xbf16>, vector<24x96xf32> -> vector<24x96xf32>
    %cst_37 = arith.constant 0.000000e+00 : f32
    %45 = vector.broadcast %cst_37 : f32 to vector<24x96xf32>
    %46 = arith.maximumf %44, %45 : vector<24x96xf32>
    %47 = arith.truncf %46 : vector<24x96xf32> to vector<24x96xbf16>
    %c4_38 = arith.constant 4 : index
    %c0_39 = arith.constant 0 : index
    %c0_40 = arith.constant 0 : index
    %48 = vector.load %arg3[%c4_38, %c0_39, %c0_40] : memref<6x96x32xbf16, #tpu.memory_space<vmem>>, vector<1x96x32xbf16>
    %49 = vector.shape_cast %48 : vector<1x96x32xbf16> to vector<96x32xbf16>
    %cst_41 = arith.constant dense<0.000000e+00> : vector<24x32xf32>
    %50 = tpu.matmul %47, %49, %cst_41 {dimension_numbers = #tpu.dot_dimension_numbers<[1], [0], [0], [1], [0, 0, 1, 1], [], []>} : vector<24x96xbf16>, vector<96x32xbf16>, vector<24x32xf32> -> vector<24x32xf32>
    %51 = arith.addf %41, %50 : vector<24x32xf32>
    %c5 = arith.constant 5 : index
    %c0_42 = arith.constant 0 : index
    %c0_43 = arith.constant 0 : index
    %52 = vector.load %arg1[%c5, %c0_42, %c0_43] : memref<6x24x432xbf16, #tpu.memory_space<vmem>>, vector<1x24x432xbf16>
    %53 = vector.shape_cast %52 : vector<1x24x432xbf16> to vector<24x432xbf16>
    %cst_44 = arith.constant dense<0.000000e+00> : vector<24x96xf32>
    %54 = tpu.matmul %53, %0, %cst_44 {dimension_numbers = #tpu.dot_dimension_numbers<[1], [0], [0], [1], [0, 0, 1, 1], [], []>} : vector<24x432xbf16>, vector<432x96xbf16>, vector<24x96xf32> -> vector<24x96xf32>
    %cst_45 = arith.constant 0.000000e+00 : f32
    %55 = vector.broadcast %cst_45 : f32 to vector<24x96xf32>
    %56 = arith.maximumf %54, %55 : vector<24x96xf32>
    %57 = arith.truncf %56 : vector<24x96xf32> to vector<24x96xbf16>
    %c5_46 = arith.constant 5 : index
    %c0_47 = arith.constant 0 : index
    %c0_48 = arith.constant 0 : index
    %58 = vector.load %arg3[%c5_46, %c0_47, %c0_48] : memref<6x96x32xbf16, #tpu.memory_space<vmem>>, vector<1x96x32xbf16>
    %59 = vector.shape_cast %58 : vector<1x96x32xbf16> to vector<96x32xbf16>
    %cst_49 = arith.constant dense<0.000000e+00> : vector<24x32xf32>
    %60 = tpu.matmul %57, %59, %cst_49 {dimension_numbers = #tpu.dot_dimension_numbers<[1], [0], [0], [1], [0, 0, 1, 1], [], []>} : vector<24x96xbf16>, vector<96x32xbf16>, vector<24x32xf32> -> vector<24x32xf32>
    %61 = arith.addf %51, %60 : vector<24x32xf32>
    %c0_50 = arith.constant 0 : index
    %c0_51 = arith.constant 0 : index
    %62 = vector.load %arg4[%c0_50, %c0_51] : memref<24x32xf32, #tpu.memory_space<vmem>>, vector<24x32xf32>
    tpu.vector_store %arg4[%c0_50, %c0_51], %61 {strides = array<i32>} : memref<24x32xf32, #tpu.memory_space<vmem>>, vector<24x32xf32>,
    return
  }
  func.func @transform_0(%arg0: i32) -> (i32, i32, i32) {
    %c0_i32 = arith.constant 0 : i32
    %c0_i32_0 = arith.constant 0 : i32
    %c0_i32_1 = arith.constant 0 : i32
    return %c0_i32, %arg0, %c0_i32_0 : i32, i32, i32
  }
  func.func @transform_1(%arg0: i32) -> (i32, i32) {
    %c0_i32 = arith.constant 0 : i32
    %c0_i32_0 = arith.constant 0 : i32
    %c0_i32_1 = arith.constant 0 : i32
    return %c0_i32, %c0_i32_0 : i32, i32
  }
  func.func @transform_2(%arg0: i32) -> (i32, i32, i32) {
    %c0_i32 = arith.constant 0 : i32
    %c0_i32_0 = arith.constant 0 : i32
    %c0_i32_1 = arith.constant 0 : i32
    %c0_i32_2 = arith.constant 0 : i32
    return %c0_i32, %c0_i32_0, %c0_i32_1 : i32, i32, i32
  }
  func.func @transform_3(%arg0: i32) -> (i32, i32) {
    %c0_i32 = arith.constant 0 : i32
    %c0_i32_0 = arith.constant 0 : i32
    return %arg0, %c0_i32 : i32, i32
  }
}

</mosaic_0001>

<llo_original>
// kernel: dnn_forward_batched.1
$region0: #{dnn_forward_batched.1}
  #allocation0 [shape = 'u32[]', space=smem, size = 0x4, offset = 0x4, fixed_abs, tag = 'smem constant byte address 0x4 - core index']
  #allocation1 [shape = 'u32[144,128]{1,0:T(1,128)}', space=vmem, size = 0x12000, scoped, tag = 'internal scratch']
  %s0 = inlined_call_operand.vmem [shape: bf16[6,24,432], index: 0, kind: input, shape index: {}]
  %s1 = inlined_call_operand.vmem [shape: bf16[432,96], index: 1, kind: input, shape index: {}]
  %s2 = inlined_call_operand.vmem [shape: bf16[6,96,32], index: 2, kind: input, shape index: {}]
  %s3 = inlined_call_operand.hbm [shape: f32[24,32], index: 3, kind: output, shape index: {}]
  %s4 = sld [smem:[#allocation0]]
  $region22: #{dnn_forward_batched.1} parent=0
    _
  %s6 = ssub.s32 1, %s4
  %s7 = scalar_select 0, %s6, %s4
  $region1: #{dnn_forward_batched.1} parent=0
    #allocation2 [shape = 'u8[12288]{0}', space=vmem, size = 0x3000, scoped, tag = 'output window, operand 0, single buffered']
    #allocation3 [shape = 's32[1]{0}', space=sflag, size = 0x4, scoped, tag = 'scoped memory for dnn_forward_batched.1']
    %8 = vsyncpa [#allocation3], 0
    // Predicated region
    $region2: #{dnn_forward_batched.1} parent=1 // pred_check
      _
    $region3: #{dnn_forward_batched.1} parent=1 // pred_check_branch
      %10 = sbr.rel (0) target = $region5
    $region4: #{dnn_forward_batched.1} parent=1 // pred_region
      _
    $region5: #{dnn_forward_batched.1} parent=1 // pred_fallthru
      _
    // Predicated region
    $region6: #{dnn_forward_batched.1} parent=1 // pred_check
      _
    $region7: #{dnn_forward_batched.1} parent=1 // pred_check_branch
      %12 = sbr.rel (0) target = $region9
    $region8: #{dnn_forward_batched.1} parent=1 // pred_region
      _
    $region9: #{dnn_forward_batched.1} parent=1 // pred_fallthru
      _
    // Predicated region
    $region10: #{dnn_forward_batched.1} parent=1 // pred_check
      _
    $region11: #{dnn_forward_batched.1} parent=1 // pred_check_branch
      %14 = sbr.rel (0) target = $region13
    $region12: #{dnn_forward_batched.1} parent=1 // pred_region
      _
    $region13: #{dnn_forward_batched.1} parent=1 // pred_fallthru
      _
    %v16 = vld [vmem:[%s1] sm:$0xf]
    %v17 = vld [vmem:[%s1 + $0x4] sm:$0xf]
    %v18 = vld [vmem:[%s1 + $0x8] sm:$0xf]
    %v19 = vld [vmem:[%s1 + $0xc] sm:$0xf]
    %v20 = vld [vmem:[%s1 + $0x10] sm:$0xf]
    %v21 = vld [vmem:[%s1 + $0x14] sm:$0xf]
    %v22 = vld [vmem:[%s1 + $0x18] sm:$0xf]
    %v23 = vld [vmem:[%s1 + $0x1c] sm:$0xf]
    %v24 = vld [vmem:[%s1 + $0x20] sm:$0xf]
    %v25 = vld [vmem:[%s1 + $0x24] sm:$0xf]
    %v26 = vld [vmem:[%s1 + $0x28] sm:$0xf]
    %v27 = vld [vmem:[%s1 + $0x2c] sm:$0xf]
    %v28 = vld [vmem:[%s1 + $0x30] sm:$0xf]
    %v29 = vld [vmem:[%s1 + $0x34] sm:$0xf]
    %v30 = vld [vmem:[%s1 + $0x38] sm:$0xf]
    %v31 = vld [vmem:[%s1 + $0x3c] sm:$0xf]
    %v32 = vld [vmem:[%s1 + $0x40] sm:$0xf]
    %v33 = vld [vmem:[%s1 + $0x44] sm:$0xf]
    %v34 = vld [vmem:[%s1 + $0x48] sm:$0xf]
    %v35 = vld [vmem:[%s1 + $0x4c] sm:$0xf]
    %v36 = vld [vmem:[%s1 + $0x50] sm:$0xf]
    %v37 = vld [vmem:[%s1 + $0x54] sm:$0xf]
    %v38 = vld [vmem:[%s1 + $0x58] sm:$0xf]
    %v39 = vld [vmem:[%s1 + $0x5c] sm:$0xf]
    %v40 = vld [vmem:[%s1 + $0x60] sm:$0xf]
    %v41 = vld [vmem:[%s1 + $0x64] sm:$0xf]
    %v42 = vld [vmem:[%s1 + $0x68] sm:$0xf]
    %v43 = vld [vmem:[%s1 + $0x6c] sm:$0xf]
    %v44 = vld [vmem:[%s1 + $0x70] sm:$0xf]
    %v45 = vld [vmem:[%s1 + $0x74] sm:$0xf]
    %v46 = vld [vmem:[%s1 + $0x78] sm:$0xf]
    %v47 = vld [vmem:[%s1 + $0x7c] sm:$0xf]
    %v48 = vld [vmem:[%s1 + $0x80] sm:$0xf]
    %v49 = vld [vmem:[%s1 + $0x84] sm:$0xf]
    %v50 = vld [vmem:[%s1 + $0x88] sm:$0xf]
    %v51 = vld [vmem:[%s1 + $0x8c] sm:$0xf]
    %v52 = vld [vmem:[%s1 + $0x90] sm:$0xf]
    %v53 = vld [vmem:[%s1 + $0x94] sm:$0xf]
    %v54 = vld [vmem:[%s1 + $0x98] sm:$0xf]
    %v55 = vld [vmem:[%s1 + $0x9c] sm:$0xf]
    %v56 = vld [vmem:[%s1 + $0xa0] sm:$0xf]
    %v57 = vld [vmem:[%s1 + $0xa4] sm:$0xf]
    %v58 = vld [vmem:[%s1 + $0xa8] sm:$0xf]
    %v59 = vld [vmem:[%s1 + $0xac] sm:$0xf]
    %v60 = vld [vmem:[%s1 + $0xb0] sm:$0xf]
    %v61 = vld [vmem:[%s1 + $0xb4] sm:$0xf]
    %v62 = vld [vmem:[%s1 + $0xb8] sm:$0xf]
    %v63 = vld [vmem:[%s1 + $0xbc] sm:$0xf]
    %v64 = vld [vmem:[%s1 + $0xc0] sm:$0xf]
    %v65 = vld [vmem:[%s1 + $0xc4] sm:$0xf]
    %v66 = vld [vmem:[%s1 + $0xc8] sm:$0xf]
    %v67 = vld [vmem:[%s1 + $0xcc] sm:$0xf]
    %v68 = vld [vmem:[%s1 + $0xd0] sm:$0xf]
    %v69 = vld [vmem:[%s1 + $0xd4] sm:$0xf]
    %v70 = vld [vmem:[%s0] sm:$0xff]
    %v71 = vld [vmem:[%s0 + $0x8] sm:$0xff]
    %v72 = vld [vmem:[%s0 + $0x10] sm:$0xff]
    %v73 = vld [vmem:[%s0 + $0x18] sm:$0xff]
    %v74 = vld [vmem:[%s0 + $0x20] sm:$0xff]
    %v75 = vld [vmem:[%s0 + $0x28] sm:$0xff]
    %v82 = vunpack.c.l.b16 %v70
    %v83 = vunpack.c.h.b16 %v70
    %v84 = vunpack.c.l.b16 %v71
    %v85 = vunpack.c.h.b16 %v71
    %v86 = vunpack.c.l.b16 %v72
    %v87 = vunpack.c.h.b16 %v72
    %v88 = vunpack.c.l.b16 %v73
    %v89 = vunpack.c.h.b16 %v73
    %v90 = vunpack.c.l.b16 %v74
    %v91 = vunpack.c.h.b16 %v74
    %v92 = vunpack.c.l.b16 %v75
    %v93 = vunpack.c.h.b16 %v75
    %v94 = vpack.c.b16 %v86, %v82
    %v95 = vpack.c.b16 %v87, %v83
    %v96 = vpack.c.b16 %v88, %v84
    %v97 = vpack.c.b16 %v89, %v85
    %v98 = vpack.c.b16 %v90, %v90
    %v99 = vpack.c.b16 %v91, %v91
    %v100 = vpack.c.b16 %v92, %v92
    %v101 = vpack.c.b16 %v93, %v93
    %v162 = vunpack.c.l.b16 %v16
    %v163 = vunpack.c.l.b16 %v17
    %v164 = vunpack.c.l.b16 %v18
    %v165 = vunpack.c.l.b16 %v19
    %v166 = vunpack.c.l.b16 %v20
    %v167 = vunpack.c.l.b16 %v21
    %v168 = vunpack.c.l.b16 %v22
    %v169 = vunpack.c.l.b16 %v23
    %v170 = vunpack.c.l.b16 %v24
    %v171 = vunpack.c.l.b16 %v25
    %v172 = vunpack.c.l.b16 %v26
    %v173 = vunpack.c.l.b16 %v27
    %v174 = vunpack.c.l.b16 %v28
    %v175 = vunpack.c.l.b16 %v29
    %v176 = vunpack.c.l.b16 %v30
    %v177 = vunpack.c.l.b16 %v31
    %v178 = vunpack.c.l.b16 %v32
    %v179 = vunpack.c.l.b16 %v33
    %v180 = vunpack.c.l.b16 %v34
    %v181 = vunpack.c.l.b16 %v35
    %v182 = vunpack.c.l.b16 %v36
    %v183 = vunpack.c.l.b16 %v37
    %v184 = vunpack.c.l.b16 %v38
    %v185 = vunpack.c.l.b16 %v39
    %v186 = vunpack.c.l.b16 %v40
    %v187 = vunpack.c.l.b16 %v41
    %v188 = vunpack.c.l.b16 %v42
    %v189 = vunpack.c.l.b16 %v43
    %v190 = vunpack.c.l.b16 %v44
    %v191 = vunpack.c.l.b16 %v45
    %v192 = vunpack.c.l.b16 %v46
    %v193 = vunpack.c.l.b16 %v47
    %v194 = vunpack.c.l.b16 %v48
    %v195 = vunpack.c.l.b16 %v49
    %v196 = vunpack.c.l.b16 %v50
    %v197 = vunpack.c.l.b16 %v51
    %v198 = vunpack.c.l.b16 %v52
    %v199 = vunpack.c.l.b16 %v53
    %v200 = vunpack.c.l.b16 %v54
    %v201 = vunpack.c.l.b16 %v55
    %v202 = vunpack.c.l.b16 %v56
    %v203 = vunpack.c.l.b16 %v57
    %v204 = vunpack.c.l.b16 %v58
    %v205 = vunpack.c.l.b16 %v59
    %v206 = vunpack.c.l.b16 %v60
    %v207 = vunpack.c.l.b16 %v61
    %v208 = vunpack.c.l.b16 %v62
    %v209 = vunpack.c.l.b16 %v63
    %v210 = vunpack.c.l.b16 %v64
    %v211 = vunpack.c.l.b16 %v65
    %v212 = vunpack.c.l.b16 %v66
    %v213 = vunpack.c.l.b16 %v67
    %v214 = vunpack.c.l.b16 %v68
    %v215 = vunpack.c.l.b16 %v69
    %v216 = vpack.c.b16 %v163, %v162
    %v217 = vpack.c.b16 %v165, %v164
    %v218 = vpack.c.b16 %v167, %v166
    %v219 = vpack.c.b16 %v169, %v168
    %v220 = vpack.c.b16 %v171, %v170
    %v221 = vpack.c.b16 %v173, %v172
    %v222 = vpack.c.b16 %v175, %v174
    %v223 = vpack.c.b16 %v177, %v176
    %v224 = vpack.c.b16 %v179, %v178
    %v225 = vpack.c.b16 %v181, %v180
    %v226 = vpack.c.b16 %v183, %v182
    %v227 = vpack.c.b16 %v185, %v184
    %v228 = vpack.c.b16 %v187, %v186
    %v229 = vpack.c.b16 %v189, %v188
    %v230 = vpack.c.b16 %v191, %v190
    %v231 = vpack.c.b16 %v193, %v192
    %v232 = vpack.c.b16 %v195, %v194
    %v233 = vpack.c.b16 %v197, %v196
    %v234 = vpack.c.b16 %v199, %v198
    %v235 = vpack.c.b16 %v201, %v200
    %v236 = vpack.c.b16 %v203, %v202
    %v237 = vpack.c.b16 %v205, %v204
    %v238 = vpack.c.b16 %v207, %v206
    %v239 = vpack.c.b16 %v209, %v208
    %v240 = vpack.c.b16 %v211, %v210
    %v241 = vpack.c.b16 %v213, %v212
    %v242 = vpack.c.b16 %v215, %v214
    %vm270 = vcmask 392192
    %v272 = vsel %vm270, %v97, 0
    %v275 = vsel %vm270, %v101, 0
    %277 = vmatprep.subr.bf16.mxu0 0
    %278 = vmatpush1.bf16.msra.mxu0 %v223
    %279 = vmatprep.subr.bf16.mxu0 0
    %280 = vmatpush1.bf16.msra.mxu0 %v222
    %281 = vmatprep.subr.bf16.mxu0 0
    %282 = vmatpush1.bf16.msra.mxu0 %v221
    %283 = vmatprep.subr.bf16.mxu0 0
    %284 = vmatpush1.bf16.msra.mxu0 %v220
    %285 = vmatprep.subr.bf16.mxu0 0
    %286 = vmatpush1.bf16.msra.mxu0 %v219
    %287 = vmatprep.subr.bf16.mxu0 0
    %288 = vmatpush1.bf16.msra.mxu0 %v218
    %289 = vmatprep.subr.bf16.mxu0 0
    %290 = vmatpush1.bf16.msra.mxu0 %v217
    %291 = vmatprep.subr.bf16.mxu0 0
    %292 = vmatpush1.bf16.msra.mxu0 %v216
    %293 = vmatprep.subr.bf16.mxu0 0
    %294 = vmatpush2.bf16.msra.mxu0 %v231
    %295 = vmatprep.subr.bf16.mxu0 0
    %296 = vmatpush2.bf16.msra.mxu0 %v230
    %297 = vmatprep.subr.bf16.mxu0 0
    %298 = vmatpush2.bf16.msra.mxu0 %v229
    %299 = vmatprep.subr.bf16.mxu0 0
    %300 = vmatpush2.bf16.msra.mxu0 %v228
    %301 = vmatprep.subr.bf16.mxu0 0
    %302 = vmatpush2.bf16.msra.mxu0 %v227
    %303 = vmatprep.subr.bf16.mxu0 0
    %304 = vmatpush2.bf16.msra.mxu0 %v226
    %305 = vmatprep.subr.bf16.mxu0 0
    %306 = vmatpush2.bf16.msra.mxu0 %v225
    %307 = vmatprep.subr.bf16.mxu0 0
    %308 = vmatpush2.bf16.msra.mxu0 %v224
    %309 = vmatprep.mubr.bf16.mxu0 %v95
    %310 = vmatmul.mubr.bf16.gmra.mxu0 %v94
    %v311 = vpop.f32.mrf.mxu0
    %v312 = vadd.f32 0.0, %v311
    %v313 = vpop.f32.mrf.mxu0
    %v314 = vpop.f32.mrf.mxu0
    %v315 = vadd.f32 0.0, %v314
    %v316 = vpop.f32.mrf.mxu0
    %317 = vmatprep.mubr.bf16.mxu0 %v99
    %318 = vmatmul.mubr.bf16.gmra.mxu0 %v98
    %v319 = vpop.f32.mrf.mxu0
    %v320 = vadd.f32 0.0, %v319
    %v321 = vpop.f32.mrf.mxu0
    %v322 = vpop.f32.mrf.mxu0
    %v323 = vpop.f32.mrf.mxu0
    %324 = vdwg.mxu0
    %325 = vmatprep.subr.bf16.mxu0 0
    %326 = vmatpush1.bf16.msra.mxu0 %v239
    %327 = vmatprep.subr.bf16.mxu0 0
    %328 = vmatpush1.bf16.msra.mxu0 %v238
    %329 = vmatprep.subr.bf16.mxu0 0
    %330 = vmatpush1.bf16.msra.mxu0 %v237
    %331 = vmatprep.subr.bf16.mxu0 0
    %332 = vmatpush1.bf16.msra.mxu0 %v236
    %333 = vmatprep.subr.bf16.mxu0 0
    %334 = vmatpush1.bf16.msra.mxu0 %v235
    %335 = vmatprep.subr.bf16.mxu0 0
    %336 = vmatpush1.bf16.msra.mxu0 %v234
    %337 = vmatprep.subr.bf16.mxu0 0
    %338 = vmatpush1.bf16.msra.mxu0 %v233
    %339 = vmatprep.subr.bf16.mxu0 0
    %340 = vmatpush1.bf16.msra.mxu0 %v232
    %341 = vmatprep.subr.bf16.mxu0 0
    %342 = vmatpush2.bf16.msra.mxu0 0
    %343 = vmatprep.subr.bf16.mxu0 0
    %344 = vmatpush2.bf16.msra.mxu0 0
    %345 = vmatprep.subr.bf16.mxu0 0
    %346 = vmatpush2.bf16.msra.mxu0 0
    %347 = vmatprep.subr.bf16.mxu0 0
    %348 = vmatpush2.bf16.msra.mxu0 0
    %349 = vmatprep.subr.bf16.mxu0 0
    %350 = vmatpush2.bf16.msra.mxu0 0
    %351 = vmatprep.subr.bf16.mxu0 0
    %352 = vmatpush2.bf16.msra.mxu0 %v242
    %353 = vmatprep.subr.bf16.mxu0 0
    %354 = vmatpush2.bf16.msra.mxu0 %v241
    %355 = vmatprep.subr.bf16.mxu0 0
    %356 = vmatpush2.bf16.msra.mxu0 %v240
    %357 = vmatprep.mubr.bf16.mxu0 %v272
    %358 = vmatmul.mubr.bf16.gmra.mxu0 %v96
    %v359 = vpop.f32.mrf.mxu0
    %v360 = vadd.f32 %v312, %v359
    %v361 = vpop.f32.mrf.mxu0
    %v362 = vpop.f32.mrf.mxu0
    %v363 = vadd.f32 %v315, %v362
    %v364 = vpop.f32.mrf.mxu0
    %365 = vmatprep.mubr.bf16.mxu0 %v275
    %366 = vmatmul.mubr.bf16.gmra.mxu0 %v100
    %v367 = vpop.f32.mrf.mxu0
    %v368 = vadd.f32 %v320, %v367
    %v369 = vpop.f32.mrf.mxu0
    %v370 = vpop.f32.mrf.mxu0
    %v371 = vpop.f32.mrf.mxu0
    %372 = vdwg.mxu0
    %v373 = vmax.f32 %v360, 0.0
    %v374 = vmax.f32 %v363, 0.0
    %v375 = vmax.f32 %v368, 0.0
    %v376 = vpack.c.bf16 %v374, %v373
    %v377 = vpack.c.bf16 %v375, %v375
    %v378 = vld [vmem:[%s2] sm:$0xf]
    %v379 = vld [vmem:[%s2 + $0x4] sm:$0xf]
    %v380 = vld [vmem:[%s2 + $0x8] sm:$0xf]
    %v381 = vld [vmem:[%s2 + $0xc] sm:$0xf]
    %v382 = vld [vmem:[%s2 + $0x10] sm:$0xf]
    %v383 = vld [vmem:[%s2 + $0x14] sm:$0xf]
    %v384 = vld [vmem:[%s2 + $0x18] sm:$0xf]
    %v385 = vld [vmem:[%s2 + $0x1c] sm:$0xf]
    %v386 = vld [vmem:[%s2 + $0x20] sm:$0xf]
    %v387 = vld [vmem:[%s2 + $0x24] sm:$0xf]
    %v388 = vld [vmem:[%s2 + $0x28] sm:$0xf]
    %v389 = vld [vmem:[%s2 + $0x2c] sm:$0xf]
    %s390 = scalar_lea.vmem %s0, 48
    %v391 = vld [vmem:[%s390] sm:$0xff]
    %v392 = vld [vmem:[%s390 + $0x8] sm:$0xff]
    %v393 = vld [vmem:[%s390 + $0x10] sm:$0xff]
    %v394 = vld [vmem:[%s390 + $0x18] sm:$0xff]
    %v395 = vld [vmem:[%s390 + $0x20] sm:$0xff]
    %v396 = vld [vmem:[%s390 + $0x28] sm:$0xff]
    %v403 = vunpack.c.l.b16 %v391
    %v404 = vunpack.c.h.b16 %v391
    %v405 = vunpack.c.l.b16 %v392
    %v406 = vunpack.c.h.b16 %v392
    %v407 = vunpack.c.l.b16 %v393
    %v408 = vunpack.c.h.b16 %v393
    %v409 = vunpack.c.l.b16 %v394
    %v410 = vunpack.c.h.b16 %v394
    %v411 = vunpack.c.l.b16 %v395
    %v412 = vunpack.c.h.b16 %v395
    %v413 = vunpack.c.l.b16 %v396
    %v414 = vunpack.c.h.b16 %v396
    %v415 = vpack.c.b16 %v407, %v403
    %v416 = vpack.c.b16 %v408, %v404
    %v417 = vpack.c.b16 %v409, %v405
    %v418 = vpack.c.b16 %v410, %v406
    %v419 = vpack.c.b16 %v411, %v411
    %v420 = vpack.c.b16 %v412, %v412
    %v421 = vpack.c.b16 %v413, %v413
    %v422 = vpack.c.b16 %v414, %v414
    %v430 = vsel %vm270, %v418, 0
    %v433 = vsel %vm270, %v422, 0
    %435 = vmatprep.subr.bf16.mxu0 0
    %436 = vmatpush1.bf16.msra.mxu0 %v223
    %437 = vmatprep.subr.bf16.mxu0 0
    %438 = vmatpush1.bf16.msra.mxu0 %v222
    %439 = vmatprep.subr.bf16.mxu0 0
    %440 = vmatpush1.bf16.msra.mxu0 %v221
    %441 = vmatprep.subr.bf16.mxu0 0
    %442 = vmatpush1.bf16.msra.mxu0 %v220
    %443 = vmatprep.subr.bf16.mxu0 0
    %444 = vmatpush1.bf16.msra.mxu0 %v219
    %445 = vmatprep.subr.bf16.mxu0 0
    %446 = vmatpush1.bf16.msra.mxu0 %v218
    %447 = vmatprep.subr.bf16.mxu0 0
    %448 = vmatpush1.bf16.msra.mxu0 %v217
    %449 = vmatprep.subr.bf16.mxu0 0
    %450 = vmatpush1.bf16.msra.mxu0 %v216
    %451 = vmatprep.subr.bf16.mxu0 0
    %452 = vmatpush2.bf16.msra.mxu0 %v231
    %453 = vmatprep.subr.bf16.mxu0 0
    %454 = vmatpush2.bf16.msra.mxu0 %v230
    %455 = vmatprep.subr.bf16.mxu0 0
    %456 = vmatpush2.bf16.msra.mxu0 %v229
    %457 = vmatprep.subr.bf16.mxu0 0
    %458 = vmatpush2.bf16.msra.mxu0 %v228
    %459 = vmatprep.subr.bf16.mxu0 0
    %460 = vmatpush2.bf16.msra.mxu0 %v227
    %461 = vmatprep.subr.bf16.mxu0 0
    %462 = vmatpush2.bf16.msra.mxu0 %v226
    %463 = vmatprep.subr.bf16.mxu0 0
    %464 = vmatpush2.bf16.msra.mxu0 %v225
    %465 = vmatprep.subr.bf16.mxu0 0
    %466 = vmatpush2.bf16.msra.mxu0 %v224
    %467 = vmatprep.mubr.bf16.mxu0 %v416
    %468 = vmatmul.mubr.bf16.gmra.mxu0 %v415
    %v469 = vpop.f32.mrf.mxu0
    %v470 = vadd.f32 0.0, %v469
    %v471 = vpop.f32.mrf.mxu0
    %v472 = vpop.f32.mrf.mxu0
    %v473 = vadd.f32 0.0, %v472
    %v474 = vpop.f32.mrf.mxu0
    %475 = vmatprep.mubr.bf16.mxu0 %v420
    %476 = vmatmul.mubr.bf16.gmra.mxu0 %v419
    %v477 = vpop.f32.mrf.mxu0
    %v478 = vadd.f32 0.0, %v477
    %v479 = vpop.f32.mrf.mxu0
    %v480 = vpop.f32.mrf.mxu0
    %v481 = vpop.f32.mrf.mxu0
    %482 = vdwg.mxu0
    %483 = vmatprep.subr.bf16.mxu0 0
    %484 = vmatpush1.bf16.msra.mxu0 %v239
    %485 = vmatprep.subr.bf16.mxu0 0
    %486 = vmatpush1.bf16.msra.mxu0 %v238
    %487 = vmatprep.subr.bf16.mxu0 0
    %488 = vmatpush1.bf16.msra.mxu0 %v237
    %489 = vmatprep.subr.bf16.mxu0 0
    %490 = vmatpush1.bf16.msra.mxu0 %v236
    %491 = vmatprep.subr.bf16.mxu0 0
    %492 = vmatpush1.bf16.msra.mxu0 %v235
    %493 = vmatprep.subr.bf16.mxu0 0
    %494 = vmatpush1.bf16.msra.mxu0 %v234
    %495 = vmatprep.subr.bf16.mxu0 0
    %496 = vmatpush1.bf16.msra.mxu0 %v233
    %497 = vmatprep.subr.bf16.mxu0 0
    %498 = vmatpush1.bf16.msra.mxu0 %v232
    %499 = vmatprep.subr.bf16.mxu0 0
    %500 = vmatpush2.bf16.msra.mxu0 0
    %501 = vmatprep.subr.bf16.mxu0 0
    %502 = vmatpush2.bf16.msra.mxu0 0
    %503 = vmatprep.subr.bf16.mxu0 0
    %504 = vmatpush2.bf16.msra.mxu0 0
    %505 = vmatprep.subr.bf16.mxu0 0
    %506 = vmatpush2.bf16.msra.mxu0 0
    %507 = vmatprep.subr.bf16.mxu0 0
    %508 = vmatpush2.bf16.msra.mxu0 0
    %509 = vmatprep.subr.bf16.mxu0 0
    %510 = vmatpush2.bf16.msra.mxu0 %v242
    %511 = vmatprep.subr.bf16.mxu0 0
    %512 = vmatpush2.bf16.msra.mxu0 %v241
    %513 = vmatprep.subr.bf16.mxu0 0
    %514 = vmatpush2.bf16.msra.mxu0 %v240
    %515 = vmatprep.mubr.bf16.mxu0 %v430
    %516 = vmatmul.mubr.bf16.gmra.mxu0 %v417
    %v517 = vpop.f32.mrf.mxu0
    %v518 = vadd.f32 %v470, %v517
    %v519 = vpop.f32.mrf.mxu0
    %v520 = vpop.f32.mrf.mxu0
    %v521 = vadd.f32 %v473, %v520
    %v522 = vpop.f32.mrf.mxu0
    %523 = vmatprep.mubr.bf16.mxu0 %v433
    %524 = vmatmul.mubr.bf16.gmra.mxu0 %v421
    %v525 = vpop.f32.mrf.mxu0
    %v526 = vadd.f32 %v478, %v525
    %v527 = vpop.f32.mrf.mxu0
    %v528 = vpop.f32.mrf.mxu0
    %v529 = vpop.f32.mrf.mxu0
    %530 = vdwg.mxu0
    %v531 = vmax.f32 %v518, 0.0
    %v532 = vmax.f32 %v521, 0.0
    %v533 = vmax.f32 %v526, 0.0
    %v534 = vpack.c.bf16 %v532, %v531
    %v535 = vpack.c.bf16 %v533, %v533
    %s536 = scalar_lea.vmem %s2, 48
    %v537 = vld [vmem:[%s536] sm:$0xf]
    %v538 = vld [vmem:[%s536 + $0x4] sm:$0xf]
    %v539 = vld [vmem:[%s536 + $0x8] sm:$0xf]
    %v540 = vld [vmem:[%s536 + $0xc] sm:$0xf]
    %v541 = vld [vmem:[%s536 + $0x10] sm:$0xf]
    %v542 = vld [vmem:[%s536 + $0x14] sm:$0xf]
    %v543 = vld [vmem:[%s536 + $0x18] sm:$0xf]
    %v544 = vld [vmem:[%s536 + $0x1c] sm:$0xf]
    %v545 = vld [vmem:[%s536 + $0x20] sm:$0xf]
    %v546 = vld [vmem:[%s536 + $0x24] sm:$0xf]
    %v547 = vld [vmem:[%s536 + $0x28] sm:$0xf]
    %v548 = vld [vmem:[%s536 + $0x2c] sm:$0xf]
    %v561 = vunpack.c.l.b16 %v537
    %v562 = vunpack.c.l.b16 %v538
    %v563 = vunpack.c.l.b16 %v539
    %v564 = vunpack.c.l.b16 %v540
    %v565 = vunpack.c.l.b16 %v541
    %v566 = vunpack.c.l.b16 %v542
    %v567 = vunpack.c.l.b16 %v543
    %v568 = vunpack.c.l.b16 %v544
    %v569 = vunpack.c.l.b16 %v545
    %v570 = vunpack.c.l.b16 %v546
    %v571 = vunpack.c.l.b16 %v547
    %v572 = vunpack.c.l.b16 %v548
    %v573 = vpack.c.b16 %v562, %v561
    %v574 = vpack.c.b16 %v564, %v563
    %v575 = vpack.c.b16 %v566, %v565
    %v576 = vpack.c.b16 %v568, %v567
    %v577 = vpack.c.b16 %v570, %v569
    %v578 = vpack.c.b16 %v572, %v571
    %vm585 = vcmask 785408
    %v587 = vsel %vm585, %v534, 0
    %v590 = vsel %vm585, %v535, 0
    %592 = vmatprep.subr.bf16.mxu0 0
    %593 = vmatpush1.bf16.msra.mxu0 0
    %594 = vmatprep.subr.bf16.mxu0 0
    %595 = vmatpush1.bf16.msra.mxu0 0
    %596 = vmatprep.subr.bf16.mxu0 0
    %597 = vmatpush1.bf16.msra.mxu0 %v578
    %598 = vmatprep.subr.bf16.mxu0 0
    %599 = vmatpush1.bf16.msra.mxu0 %v577
    %600 = vmatprep.subr.bf16.mxu0 0
    %601 = vmatpush1.bf16.msra.mxu0 %v576
    %602 = vmatprep.subr.bf16.mxu0 0
    %603 = vmatpush1.bf16.msra.mxu0 %v575
    %604 = vmatprep.subr.bf16.mxu0 0
    %605 = vmatpush1.bf16.msra.mxu0 %v574
    %606 = vmatprep.subr.bf16.mxu0 0
    %607 = vmatpush1.bf16.msra.mxu0 %v573
    %608 = vmatprep.subr.bf16.mxu0 0
    %609 = vmatpush2.bf16.msra.mxu0 0
    %610 = vmatprep.subr.bf16.mxu0 0
    %611 = vmatpush2.bf16.msra.mxu0 0
    %612 = vmatprep.subr.bf16.mxu0 0
    %613 = vmatpush2.bf16.msra.mxu0 0
    %614 = vmatprep.subr.bf16.mxu0 0
    %615 = vmatpush2.bf16.msra.mxu0 0
    %616 = vmatprep.subr.bf16.mxu0 0
    %617 = vmatpush2.bf16.msra.mxu0 0
    %618 = vmatprep.subr.bf16.mxu0 0
    %619 = vmatpush2.bf16.msra.mxu0 0
    %620 = vmatprep.subr.bf16.mxu0 0
    %621 = vmatpush2.bf16.msra.mxu0 0
    %622 = vmatprep.subr.bf16.mxu0 0
    %623 = vmatpush2.bf16.msra.mxu0 0
    %624 = vmatprep.mubr.bf16.mxu0 0
    %625 = vmatmul.mubr.bf16.gmra.mxu0 %v587
    %v626 = vpop.f32.mrf.mxu0
    %v627 = vadd.f32 0.0, %v626
    %v628 = vpop.f32.mrf.mxu0
    %v629 = vpop.f32.mrf.mxu0
    %v630 = vadd.f32 0.0, %v629
    %v631 = vpop.f32.mrf.mxu0
    %632 = vmatprep.mubr.bf16.mxu0 0
    %633 = vmatmul.mubr.bf16.gmra.mxu0 %v590
    %v634 = vpop.f32.mrf.mxu0
    %v635 = vadd.f32 0.0, %v634
    %v636 = vpop.f32.mrf.mxu0
    %v637 = vpop.f32.mrf.mxu0
    %v638 = vpop.f32.mrf.mxu0
    %639 = vdwg.mxu0
    %v652 = vunpack.c.l.b16 %v378
    %v653 = vunpack.c.l.b16 %v379
    %v654 = vunpack.c.l.b16 %v380
    %v655 = vunpack.c.l.b16 %v381
    %v656 = vunpack.c.l.b16 %v382
    %v657 = vunpack.c.l.b16 %v383
    %v658 = vunpack.c.l.b16 %v384
    %v659 = vunpack.c.l.b16 %v385
    %v660 = vunpack.c.l.b16 %v386
    %v661 = vunpack.c.l.b16 %v387
    %v662 = vunpack.c.l.b16 %v388
    %v663 = vunpack.c.l.b16 %v389
    %v664 = vpack.c.b16 %v653, %v652
    %v665 = vpack.c.b16 %v655, %v654
    %v666 = vpack.c.b16 %v657, %v656
    %v667 = vpack.c.b16 %v659, %v658
    %v668 = vpack.c.b16 %v661, %v660
    %v669 = vpack.c.b16 %v663, %v662
    %v677 = vsel %vm585, %v376, 0
    %v680 = vsel %vm585, %v377, 0
    %682 = vmatprep.subr.bf16.mxu0 0
    %683 = vmatpush1.bf16.msra.mxu0 0
    %684 = vmatprep.subr.bf16.mxu0 0
    %685 = vmatpush1.bf16.msra.mxu0 0
    %686 = vmatprep.subr.bf16.mxu0 0
    %687 = vmatpush1.bf16.msra.mxu0 %v669
    %688 = vmatprep.subr.bf16.mxu0 0
    %689 = vmatpush1.bf16.msra.mxu0 %v668
    %690 = vmatprep.subr.bf16.mxu0 0
    %691 = vmatpush1.bf16.msra.mxu0 %v667
    %692 = vmatprep.subr.bf16.mxu0 0
    %693 = vmatpush1.bf16.msra.mxu0 %v666
    %694 = vmatprep.subr.bf16.mxu0 0
    %695 = vmatpush1.bf16.msra.mxu0 %v665
    %696 = vmatprep.subr.bf16.mxu0 0
    %697 = vmatpush1.bf16.msra.mxu0 %v664
    %698 = vmatprep.subr.bf16.mxu0 0
    %699 = vmatpush2.bf16.msra.mxu0 0
    %700 = vmatprep.subr.bf16.mxu0 0
    %701 = vmatpush2.bf16.msra.mxu0 0
    %702 = vmatprep.subr.bf16.mxu0 0
    %703 = vmatpush2.bf16.msra.mxu0 0
    %704 = vmatprep.subr.bf16.mxu0 0
    %705 = vmatpush2.bf16.msra.mxu0 0
    %706 = vmatprep.subr.bf16.mxu0 0
    %707 = vmatpush2.bf16.msra.mxu0 0
    %708 = vmatprep.subr.bf16.mxu0 0
    %709 = vmatpush2.bf16.msra.mxu0 0
    %710 = vmatprep.subr.bf16.mxu0 0
    %711 = vmatpush2.bf16.msra.mxu0 0
    %712 = vmatprep.subr.bf16.mxu0 0
    %713 = vmatpush2.bf16.msra.mxu0 0
    %714 = vmatprep.mubr.bf16.mxu0 0
    %715 = vmatmul.mubr.bf16.gmra.mxu0 %v677
    %v716 = vpop.f32.mrf.mxu0
    %v717 = vadd.f32 %v627, %v716
    %v718 = vpop.f32.mrf.mxu0
    %v719 = vpop.f32.mrf.mxu0
    %v720 = vadd.f32 %v630, %v719
    %v721 = vpop.f32.mrf.mxu0
    %722 = vmatprep.mubr.bf16.mxu0 0
    %723 = vmatmul.mubr.bf16.gmra.mxu0 %v680
    %v724 = vpop.f32.mrf.mxu0
    %v725 = vadd.f32 %v635, %v724
    %v726 = vpop.f32.mrf.mxu0
    %v727 = vpop.f32.mrf.mxu0
    %v728 = vpop.f32.mrf.mxu0
    %729 = vdwg.mxu0
    %s730 = scalar_lea.vmem %s0, 96
    %v731 = vld [vmem:[%s730] sm:$0xff]
    %v732 = vld [vmem:[%s730 + $0x8] sm:$0xff]
    %v733 = vld [vmem:[%s730 + $0x10] sm:$0xff]
    %v734 = vld [vmem:[%s730 + $0x18] sm:$0xff]
    %v735 = vld [vmem:[%s730 + $0x20] sm:$0xff]
    %v736 = vld [vmem:[%s730 + $0x28] sm:$0xff]
    %v743 = vunpack.c.l.b16 %v731
    %v744 = vunpack.c.h.b16 %v731
    %v745 = vunpack.c.l.b16 %v732
    %v746 = vunpack.c.h.b16 %v732
    %v747 = vunpack.c.l.b16 %v733
    %v748 = vunpack.c.h.b16 %v733
    %v749 = vunpack.c.l.b16 %v734
    %v750 = vunpack.c.h.b16 %v734
    %v751 = vunpack.c.l.b16 %v735
    %v752 = vunpack.c.h.b16 %v735
    %v753 = vunpack.c.l.b16 %v736
    %v754 = vunpack.c.h.b16 %v736
    %v755 = vpack.c.b16 %v747, %v743
    %v756 = vpack.c.b16 %v748, %v744
    %v757 = vpack.c.b16 %v749, %v745
    %v758 = vpack.c.b16 %v750, %v746
    %v759 = vpack.c.b16 %v751, %v751
    %v760 = vpack.c.b16 %v752, %v752
    %v761 = vpack.c.b16 %v753, %v753
    %v762 = vpack.c.b16 %v754, %v754
    %v770 = vsel %vm270, %v758, 0
    %v773 = vsel %vm270, %v762, 0
    %775 = vmatprep.subr.bf16.mxu0 0
    %776 = vmatpush1.bf16.msra.mxu0 %v223
    %777 = vmatprep.subr.bf16.mxu0 0
    %778 = vmatpush1.bf16.msra.mxu0 %v222
    %779 = vmatprep.subr.bf16.mxu0 0
    %780 = vmatpush1.bf16.msra.mxu0 %v221
    %781 = vmatprep.subr.bf16.mxu0 0
    %782 = vmatpush1.bf16.msra.mxu0 %v220
    %783 = vmatprep.subr.bf16.mxu0 0
    %784 = vmatpush1.bf16.msra.mxu0 %v219
    %785 = vmatprep.subr.bf16.mxu0 0
    %786 = vmatpush1.bf16.msra.mxu0 %v218
    %787 = vmatprep.subr.bf16.mxu0 0
    %788 = vmatpush1.bf16.msra.mxu0 %v217
    %789 = vmatprep.subr.bf16.mxu0 0
    %790 = vmatpush1.bf16.msra.mxu0 %v216
    %791 = vmatprep.subr.bf16.mxu0 0
    %792 = vmatpush2.bf16.msra.mxu0 %v231
    %793 = vmatprep.subr.bf16.mxu0 0
    %794 = vmatpush2.bf16.msra.mxu0 %v230
    %795 = vmatprep.subr.bf16.mxu0 0
    %796 = vmatpush2.bf16.msra.mxu0 %v229
    %797 = vmatprep.subr.bf16.mxu0 0
    %798 = vmatpush2.bf16.msra.mxu0 %v228
    %799 = vmatprep.subr.bf16.mxu0 0
    %800 = vmatpush2.bf16.msra.mxu0 %v227
    %801 = vmatprep.subr.bf16.mxu0 0
    %802 = vmatpush2.bf16.msra.mxu0 %v226
    %803 = vmatprep.subr.bf16.mxu0 0
    %804 = vmatpush2.bf16.msra.mxu0 %v225
    %805 = vmatprep.subr.bf16.mxu0 0
    %806 = vmatpush2.bf16.msra.mxu0 %v224
    %807 = vmatprep.mubr.bf16.mxu0 %v756
    %808 = vmatmul.mubr.bf16.gmra.mxu0 %v755
    %v809 = vpop.f32.mrf.mxu0
    %v810 = vadd.f32 0.0, %v809
    %v811 = vpop.f32.mrf.mxu0
    %v812 = vpop.f32.mrf.mxu0
    %v813 = vadd.f32 0.0, %v812
    %v814 = vpop.f32.mrf.mxu0
    %815 = vmatprep.mubr.bf16.mxu0 %v760
    %816 = vmatmul.mubr.bf16.gmra.mxu0 %v759
    %v817 = vpop.f32.mrf.mxu0
    %v818 = vadd.f32 0.0, %v817
    %v819 = vpop.f32.mrf.mxu0
    %v820 = vpop.f32.mrf.mxu0
    %v821 = vpop.f32.mrf.mxu0
    %822 = vdwg.mxu0
    %823 = vmatprep.subr.bf16.mxu0 0
    %824 = vmatpush1.bf16.msra.mxu0 %v239
    %825 = vmatprep.subr.bf16.mxu0 0
    %826 = vmatpush1.bf16.msra.mxu0 %v238
    %827 = vmatprep.subr.bf16.mxu0 0
    %828 = vmatpush1.bf16.msra.mxu0 %v237
    %829 = vmatprep.subr.bf16.mxu0 0
    %830 = vmatpush1.bf16.msra.mxu0 %v236
    %831 = vmatprep.subr.bf16.mxu0 0
    %832 = vmatpush1.bf16.msra.mxu0 %v235
    %833 = vmatprep.subr.bf16.mxu0 0
    %834 = vmatpush1.bf16.msra.mxu0 %v234
    %835 = vmatprep.subr.bf16.mxu0 0
    %836 = vmatpush1.bf16.msra.mxu0 %v233
    %837 = vmatprep.subr.bf16.mxu0 0
    %838 = vmatpush1.bf16.msra.mxu0 %v232
    %839 = vmatprep.subr.bf16.mxu0 0
    %840 = vmatpush2.bf16.msra.mxu0 0
    %841 = vmatprep.subr.bf16.mxu0 0
    %842 = vmatpush2.bf16.msra.mxu0 0
    %843 = vmatprep.subr.bf16.mxu0 0
    %844 = vmatpush2.bf16.msra.mxu0 0
    %845 = vmatprep.subr.bf16.mxu0 0
    %846 = vmatpush2.bf16.msra.mxu0 0
    %847 = vmatprep.subr.bf16.mxu0 0
    %848 = vmatpush2.bf16.msra.mxu0 0
    %849 = vmatprep.subr.bf16.mxu0 0
    %850 = vmatpush2.bf16.msra.mxu0 %v242
    %851 = vmatprep.subr.bf16.mxu0 0
    %852 = vmatpush2.bf16.msra.mxu0 %v241
    %853 = vmatprep.subr.bf16.mxu0 0
    %854 = vmatpush2.bf16.msra.mxu0 %v240
    %855 = vmatprep.mubr.bf16.mxu0 %v770
    %856 = vmatmul.mubr.bf16.gmra.mxu0 %v757
    %v857 = vpop.f32.mrf.mxu0
    %v858 = vadd.f32 %v810, %v857
    %v859 = vpop.f32.mrf.mxu0
    %v860 = vpop.f32.mrf.mxu0
    %v861 = vadd.f32 %v813, %v860
    %v862 = vpop.f32.mrf.mxu0
    %863 = vmatprep.mubr.bf16.mxu0 %v773
    %864 = vmatmul.mubr.bf16.gmra.mxu0 %v761
    %v865 = vpop.f32.mrf.mxu0
    %v866 = vadd.f32 %v818, %v865
    %v867 = vpop.f32.mrf.mxu0
    %v868 = vpop.f32.mrf.mxu0
    %v869 = vpop.f32.mrf.mxu0
    %870 = vdwg.mxu0
    %v871 = vmax.f32 %v858, 0.0
    %v872 = vmax.f32 %v861, 0.0
    %v873 = vmax.f32 %v866, 0.0
    %v874 = vpack.c.bf16 %v872, %v871
    %v875 = vpack.c.bf16 %v873, %v873
    %s876 = scalar_lea.vmem %s2, 96
    %v877 = vld [vmem:[%s876] sm:$0xf]
    %v878 = vld [vmem:[%s876 + $0x4] sm:$0xf]
    %v879 = vld [vmem:[%s876 + $0x8] sm:$0xf]
    %v880 = vld [vmem:[%s876 + $0xc] sm:$0xf]
    %v881 = vld [vmem:[%s876 + $0x10] sm:$0xf]
    %v882 = vld [vmem:[%s876 + $0x14] sm:$0xf]
    %v883 = vld [vmem:[%s876 + $0x18] sm:$0xf]
    %v884 = vld [vmem:[%s876 + $0x1c] sm:$0xf]
    %v885 = vld [vmem:[%s876 + $0x20] sm:$0xf]
    %v886 = vld [vmem:[%s876 + $0x24] sm:$0xf]
    %v887 = vld [vmem:[%s876 + $0x28] sm:$0xf]
    %v888 = vld [vmem:[%s876 + $0x2c] sm:$0xf]
    %v901 = vunpack.c.l.b16 %v877
    %v902 = vunpack.c.l.b16 %v878
    %v903 = vunpack.c.l.b16 %v879
    %v904 = vunpack.c.l.b16 %v880
    %v905 = vunpack.c.l.b16 %v881
    %v906 = vunpack.c.l.b16 %v882
    %v907 = vunpack.c.l.b16 %v883
    %v908 = vunpack.c.l.b16 %v884
    %v909 = vunpack.c.l.b16 %v885
    %v910 = vunpack.c.l.b16 %v886
    %v911 = vunpack.c.l.b16 %v887
    %v912 = vunpack.c.l.b16 %v888
    %v913 = vpack.c.b16 %v902, %v901
    %v914 = vpack.c.b16 %v904, %v903
    %v915 = vpack.c.b16 %v906, %v905
    %v916 = vpack.c.b16 %v908, %v907
    %v917 = vpack.c.b16 %v910, %v909
    %v918 = vpack.c.b16 %v912, %v911
    %v926 = vsel %vm585, %v874, 0
    %v929 = vsel %vm585, %v875, 0
    %931 = vmatprep.subr.bf16.mxu0 0
    %932 = vmatpush1.bf16.msra.mxu0 0
    %933 = vmatprep.subr.bf16.mxu0 0
    %934 = vmatpush1.bf16.msra.mxu0 0
    %935 = vmatprep.subr.bf16.mxu0 0
    %936 = vmatpush1.bf16.msra.mxu0 %v918
    %937 = vmatprep.subr.bf16.mxu0 0
    %938 = vmatpush1.bf16.msra.mxu0 %v917
    %939 = vmatprep.subr.bf16.mxu0 0
    %940 = vmatpush1.bf16.msra.mxu0 %v916
    %941 = vmatprep.subr.bf16.mxu0 0
    %942 = vmatpush1.bf16.msra.mxu0 %v915
    %943 = vmatprep.subr.bf16.mxu0 0
    %944 = vmatpush1.bf16.msra.mxu0 %v914
    %945 = vmatprep.subr.bf16.mxu0 0
    %946 = vmatpush1.bf16.msra.mxu0 %v913
    %947 = vmatprep.subr.bf16.mxu0 0
    %948 = vmatpush2.bf16.msra.mxu0 0
    %949 = vmatprep.subr.bf16.mxu0 0
    %950 = vmatpush2.bf16.msra.mxu0 0
    %951 = vmatprep.subr.bf16.mxu0 0
    %952 = vmatpush2.bf16.msra.mxu0 0
    %953 = vmatprep.subr.bf16.mxu0 0
    %954 = vmatpush2.bf16.msra.mxu0 0
    %955 = vmatprep.subr.bf16.mxu0 0
    %956 = vmatpush2.bf16.msra.mxu0 0
    %957 = vmatprep.subr.bf16.mxu0 0
    %958 = vmatpush2.bf16.msra.mxu0 0
    %959 = vmatprep.subr.bf16.mxu0 0
    %960 = vmatpush2.bf16.msra.mxu0 0
    %961 = vmatprep.subr.bf16.mxu0 0
    %962 = vmatpush2.bf16.msra.mxu0 0
    %963 = vmatprep.mubr.bf16.mxu0 0
    %964 = vmatmul.mubr.bf16.gmra.mxu0 %v926
    %v965 = vpop.f32.mrf.mxu0
    %v966 = vadd.f32 0.0, %v965
    %v967 = vpop.f32.mrf.mxu0
    %v968 = vpop.f32.mrf.mxu0
    %v969 = vadd.f32 0.0, %v968
    %v970 = vpop.f32.mrf.mxu0
    %971 = vmatprep.mubr.bf16.mxu0 0
    %972 = vmatmul.mubr.bf16.gmra.mxu0 %v929
    %v973 = vpop.f32.mrf.mxu0
    %v974 = vadd.f32 0.0, %v973
    %v975 = vpop.f32.mrf.mxu0
    %v976 = vpop.f32.mrf.mxu0
    %v977 = vpop.f32.mrf.mxu0
    %978 = vdwg.mxu0
    %v979 = vadd.f32 %v717, %v966
    %v980 = vadd.f32 %v720, %v969
    %v981 = vadd.f32 %v725, %v974
    %s982 = scalar_lea.vmem %s0, 144
    %v983 = vld [vmem:[%s982] sm:$0xff]
    %v984 = vld [vmem:[%s982 + $0x8] sm:$0xff]
    %v985 = vld [vmem:[%s982 + $0x10] sm:$0xff]
    %v986 = vld [vmem:[%s982 + $0x18] sm:$0xff]
    %v987 = vld [vmem:[%s982 + $0x20] sm:$0xff]
    %v988 = vld [vmem:[%s982 + $0x28] sm:$0xff]
    %v995 = vunpack.c.l.b16 %v983
    %v996 = vunpack.c.h.b16 %v983
    %v997 = vunpack.c.l.b16 %v984
    %v998 = vunpack.c.h.b16 %v984
    %v999 = vunpack.c.l.b16 %v985
    %v1000 = vunpack.c.h.b16 %v985
    %v1001 = vunpack.c.l.b16 %v986
    %v1002 = vunpack.c.h.b16 %v986
    %v1003 = vunpack.c.l.b16 %v987
    %v1004 = vunpack.c.h.b16 %v987
    %v1005 = vunpack.c.l.b16 %v988
    %v1006 = vunpack.c.h.b16 %v988
    %v1007 = vpack.c.b16 %v999, %v995
    %v1008 = vpack.c.b16 %v1000, %v996
    %v1009 = vpack.c.b16 %v1001, %v997
    %v1010 = vpack.c.b16 %v1002, %v998
    %v1011 = vpack.c.b16 %v1003, %v1003
    %v1012 = vpack.c.b16 %v1004, %v1004
    %v1013 = vpack.c.b16 %v1005, %v1005
    %v1014 = vpack.c.b16 %v1006, %v1006
    %v1022 = vsel %vm270, %v1010, 0
    %v1025 = vsel %vm270, %v1014, 0
    %1027 = vmatprep.subr.bf16.mxu0 0
    %1028 = vmatpush1.bf16.msra.mxu0 %v223
    %1029 = vmatprep.subr.bf16.mxu0 0
    %1030 = vmatpush1.bf16.msra.mxu0 %v222
    %1031 = vmatprep.subr.bf16.mxu0 0
    %1032 = vmatpush1.bf16.msra.mxu0 %v221
    %1033 = vmatprep.subr.bf16.mxu0 0
    %1034 = vmatpush1.bf16.msra.mxu0 %v220
    %1035 = vmatprep.subr.bf16.mxu0 0
    %1036 = vmatpush1.bf16.msra.mxu0 %v219
    %1037 = vmatprep.subr.bf16.mxu0 0
    %1038 = vmatpush1.bf16.msra.mxu0 %v218
    %1039 = vmatprep.subr.bf16.mxu0 0
    %1040 = vmatpush1.bf16.msra.mxu0 %v217
    %1041 = vmatprep.subr.bf16.mxu0 0
    %1042 = vmatpush1.bf16.msra.mxu0 %v216
    %1043 = vmatprep.subr.bf16.mxu0 0
    %1044 = vmatpush2.bf16.msra.mxu0 %v231
    %1045 = vmatprep.subr.bf16.mxu0 0
    %1046 = vmatpush2.bf16.msra.mxu0 %v230
    %1047 = vmatprep.subr.bf16.mxu0 0
    %1048 = vmatpush2.bf16.msra.mxu0 %v229
    %1049 = vmatprep.subr.bf16.mxu0 0
    %1050 = vmatpush2.bf16.msra.mxu0 %v228
    %1051 = vmatprep.subr.bf16.mxu0 0
    %1052 = vmatpush2.bf16.msra.mxu0 %v227
    %1053 = vmatprep.subr.bf16.mxu0 0
    %1054 = vmatpush2.bf16.msra.mxu0 %v226
    %1055 = vmatprep.subr.bf16.mxu0 0
    %1056 = vmatpush2.bf16.msra.mxu0 %v225
    %1057 = vmatprep.subr.bf16.mxu0 0
    %1058 = vmatpush2.bf16.msra.mxu0 %v224
    %1059 = vmatprep.mubr.bf16.mxu0 %v1008
    %1060 = vmatmul.mubr.bf16.gmra.mxu0 %v1007
    %v1061 = vpop.f32.mrf.mxu0
    %v1062 = vadd.f32 0.0, %v1061
    %v1063 = vpop.f32.mrf.mxu0
    %v1064 = vpop.f32.mrf.mxu0
    %v1065 = vadd.f32 0.0, %v1064
    %v1066 = vpop.f32.mrf.mxu0
    %1067 = vmatprep.mubr.bf16.mxu0 %v1012
    %1068 = vmatmul.mubr.bf16.gmra.mxu0 %v1011
    %v1069 = vpop.f32.mrf.mxu0
    %v1070 = vadd.f32 0.0, %v1069
    %v1071 = vpop.f32.mrf.mxu0
    %v1072 = vpop.f32.mrf.mxu0
    %v1073 = vpop.f32.mrf.mxu0
    %1074 = vdwg.mxu0
    %1075 = vmatprep.subr.bf16.mxu0 0
    %1076 = vmatpush1.bf16.msra.mxu0 %v239
    %1077 = vmatprep.subr.bf16.mxu0 0
    %1078 = vmatpush1.bf16.msra.mxu0 %v238
    %1079 = vmatprep.subr.bf16.mxu0 0
    %1080 = vmatpush1.bf16.msra.mxu0 %v237
    %1081 = vmatprep.subr.bf16.mxu0 0
    %1082 = vmatpush1.bf16.msra.mxu0 %v236
    %1083 = vmatprep.subr.bf16.mxu0 0
    %1084 = vmatpush1.bf16.msra.mxu0 %v235
    %1085 = vmatprep.subr.bf16.mxu0 0
    %1086 = vmatpush1.bf16.msra.mxu0 %v234
    %1087 = vmatprep.subr.bf16.mxu0 0
    %1088 = vmatpush1.bf16.msra.mxu0 %v233
    %1089 = vmatprep.subr.bf16.mxu0 0
    %1090 = vmatpush1.bf16.msra.mxu0 %v232
    %1091 = vmatprep.subr.bf16.mxu0 0
    %1092 = vmatpush2.bf16.msra.mxu0 0
    %1093 = vmatprep.subr.bf16.mxu0 0
    %1094 = vmatpush2.bf16.msra.mxu0 0
    %1095 = vmatprep.subr.bf16.mxu0 0
    %1096 = vmatpush2.bf16.msra.mxu0 0
    %1097 = vmatprep.subr.bf16.mxu0 0
    %1098 = vmatpush2.bf16.msra.mxu0 0
    %1099 = vmatprep.subr.bf16.mxu0 0
    %1100 = vmatpush2.bf16.msra.mxu0 0
    %1101 = vmatprep.subr.bf16.mxu0 0
    %1102 = vmatpush2.bf16.msra.mxu0 %v242
    %1103 = vmatprep.subr.bf16.mxu0 0
    %1104 = vmatpush2.bf16.msra.mxu0 %v241
    %1105 = vmatprep.subr.bf16.mxu0 0
    %1106 = vmatpush2.bf16.msra.mxu0 %v240
    %1107 = vmatprep.mubr.bf16.mxu0 %v1022
    %1108 = vmatmul.mubr.bf16.gmra.mxu0 %v1009
    %v1109 = vpop.f32.mrf.mxu0
    %v1110 = vadd.f32 %v1062, %v1109
    %v1111 = vpop.f32.mrf.mxu0
    %v1112 = vpop.f32.mrf.mxu0
    %v1113 = vadd.f32 %v1065, %v1112
    %v1114 = vpop.f32.mrf.mxu0
    %1115 = vmatprep.mubr.bf16.mxu0 %v1025
    %1116 = vmatmul.mubr.bf16.gmra.mxu0 %v1013
    %v1117 = vpop.f32.mrf.mxu0
    %v1118 = vadd.f32 %v1070, %v1117
    %v1119 = vpop.f32.mrf.mxu0
    %v1120 = vpop.f32.mrf.mxu0
    %v1121 = vpop.f32.mrf.mxu0
    %1122 = vdwg.mxu0
    %v1123 = vmax.f32 %v1110, 0.0
    %v1124 = vmax.f32 %v1113, 0.0
    %v1125 = vmax.f32 %v1118, 0.0
    %v1126 = vpack.c.bf16 %v1124, %v1123
    %v1127 = vpack.c.bf16 %v1125, %v1125
    %s1128 = scalar_lea.vmem %s2, 144
    %v1129 = vld [vmem:[%s1128] sm:$0xf]
    %v1130 = vld [vmem:[%s1128 + $0x4] sm:$0xf]
    %v1131 = vld [vmem:[%s1128 + $0x8] sm:$0xf]
    %v1132 = vld [vmem:[%s1128 + $0xc] sm:$0xf]
    %v1133 = vld [vmem:[%s1128 + $0x10] sm:$0xf]
    %v1134 = vld [vmem:[%s1128 + $0x14] sm:$0xf]
    %v1135 = vld [vmem:[%s1128 + $0x18] sm:$0xf]
    %v1136 = vld [vmem:[%s1128 + $0x1c] sm:$0xf]
    %v1137 = vld [vmem:[%s1128 + $0x20] sm:$0xf]
    %v1138 = vld [vmem:[%s1128 + $0x24] sm:$0xf]
    %v1139 = vld [vmem:[%s1128 + $0x28] sm:$0xf]
    %v1140 = vld [vmem:[%s1128 + $0x2c] sm:$0xf]
    %v1153 = vunpack.c.l.b16 %v1129
    %v1154 = vunpack.c.l.b16 %v1130
    %v1155 = vunpack.c.l.b16 %v1131
    %v1156 = vunpack.c.l.b16 %v1132
    %v1157 = vunpack.c.l.b16 %v1133
    %v1158 = vunpack.c.l.b16 %v1134
    %v1159 = vunpack.c.l.b16 %v1135
    %v1160 = vunpack.c.l.b16 %v1136
    %v1161 = vunpack.c.l.b16 %v1137
    %v1162 = vunpack.c.l.b16 %v1138
    %v1163 = vunpack.c.l.b16 %v1139
    %v1164 = vunpack.c.l.b16 %v1140
    %v1165 = vpack.c.b16 %v1154, %v1153
    %v1166 = vpack.c.b16 %v1156, %v1155
    %v1167 = vpack.c.b16 %v1158, %v1157
    %v1168 = vpack.c.b16 %v1160, %v1159
    %v1169 = vpack.c.b16 %v1162, %v1161
    %v1170 = vpack.c.b16 %v1164, %v1163
    %v1178 = vsel %vm585, %v1126, 0
    %v1181 = vsel %vm585, %v1127, 0
    %1183 = vmatprep.subr.bf16.mxu0 0
    %1184 = vmatpush1.bf16.msra.mxu0 0
    %1185 = vmatprep.subr.bf16.mxu0 0
    %1186 = vmatpush1.bf16.msra.mxu0 0
    %1187 = vmatprep.subr.bf16.mxu0 0
    %1188 = vmatpush1.bf16.msra.mxu0 %v1170
    %1189 = vmatprep.subr.bf16.mxu0 0
    %1190 = vmatpush1.bf16.msra.mxu0 %v1169
    %1191 = vmatprep.subr.bf16.mxu0 0
    %1192 = vmatpush1.bf16.msra.mxu0 %v1168
    %1193 = vmatprep.subr.bf16.mxu0 0
    %1194 = vmatpush1.bf16.msra.mxu0 %v1167
    %1195 = vmatprep.subr.bf16.mxu0 0
    %1196 = vmatpush1.bf16.msra.mxu0 %v1166
    %1197 = vmatprep.subr.bf16.mxu0 0
    %1198 = vmatpush1.bf16.msra.mxu0 %v1165
    %1199 = vmatprep.subr.bf16.mxu0 0
    %1200 = vmatpush2.bf16.msra.mxu0 0
    %1201 = vmatprep.subr.bf16.mxu0 0
    %1202 = vmatpush2.bf16.msra.mxu0 0
    %1203 = vmatprep.subr.bf16.mxu0 0
    %1204 = vmatpush2.bf16.msra.mxu0 0
    %1205 = vmatprep.subr.bf16.mxu0 0
    %1206 = vmatpush2.bf16.msra.mxu0 0
    %1207 = vmatprep.subr.bf16.mxu0 0
    %1208 = vmatpush2.bf16.msra.mxu0 0
    %1209 = vmatprep.subr.bf16.mxu0 0
    %1210 = vmatpush2.bf16.msra.mxu0 0
    %1211 = vmatprep.subr.bf16.mxu0 0
    %1212 = vmatpush2.bf16.msra.mxu0 0
    %1213 = vmatprep.subr.bf16.mxu0 0
    %1214 = vmatpush2.bf16.msra.mxu0 0
    %1215 = vmatprep.mubr.bf16.mxu0 0
    %1216 = vmatmul.mubr.bf16.gmra.mxu0 %v1178
    %v1217 = vpop.f32.mrf.mxu0
    %v1218 = vadd.f32 0.0, %v1217
    %v1219 = vpop.f32.mrf.mxu0
    %v1220 = vpop.f32.mrf.mxu0
    %v1221 = vadd.f32 0.0, %v1220
    %v1222 = vpop.f32.mrf.mxu0
    %1223 = vmatprep.mubr.bf16.mxu0 0
    %1224 = vmatmul.mubr.bf16.gmra.mxu0 %v1181
    %v1225 = vpop.f32.mrf.mxu0
    %v1226 = vadd.f32 0.0, %v1225
    %v1227 = vpop.f32.mrf.mxu0
    %v1228 = vpop.f32.mrf.mxu0
    %v1229 = vpop.f32.mrf.mxu0
    %1230 = vdwg.mxu0
    %v1231 = vadd.f32 %v979, %v1218
    %v1232 = vadd.f32 %v980, %v1221
    %v1233 = vadd.f32 %v981, %v1226
    %s1234 = scalar_lea.vmem %s0, 192
    %v1235 = vld [vmem:[%s1234] sm:$0xff]
    %v1236 = vld [vmem:[%s1234 + $0x8] sm:$0xff]
    %v1237 = vld [vmem:[%s1234 + $0x10] sm:$0xff]
    %v1238 = vld [vmem:[%s1234 + $0x18] sm:$0xff]
    %v1239 = vld [vmem:[%s1234 + $0x20] sm:$0xff]
    %v1240 = vld [vmem:[%s1234 + $0x28] sm:$0xff]
    %v1247 = vunpack.c.l.b16 %v1235
    %v1248 = vunpack.c.h.b16 %v1235
    %v1249 = vunpack.c.l.b16 %v1236
    %v1250 = vunpack.c.h.b16 %v1236
    %v1251 = vunpack.c.l.b16 %v1237
    %v1252 = vunpack.c.h.b16 %v1237
    %v1253 = vunpack.c.l.b16 %v1238
    %v1254 = vunpack.c.h.b16 %v1238
    %v1255 = vunpack.c.l.b16 %v1239
    %v1256 = vunpack.c.h.b16 %v1239
    %v1257 = vunpack.c.l.b16 %v1240
    %v1258 = vunpack.c.h.b16 %v1240
    %v1259 = vpack.c.b16 %v1251, %v1247
    %v1260 = vpack.c.b16 %v1252, %v1248
    %v1261 = vpack.c.b16 %v1253, %v1249
    %v1262 = vpack.c.b16 %v1254, %v1250
    %v1263 = vpack.c.b16 %v1255, %v1255
    %v1264 = vpack.c.b16 %v1256, %v1256
    %v1265 = vpack.c.b16 %v1257, %v1257
    %v1266 = vpack.c.b16 %v1258, %v1258
    %v1274 = vsel %vm270, %v1262, 0
    %v1277 = vsel %vm270, %v1266, 0
    %1279 = vmatprep.subr.bf16.mxu0 0
    %1280 = vmatpush1.bf16.msra.mxu0 %v223
    %1281 = vmatprep.subr.bf16.mxu0 0
    %1282 = vmatpush1.bf16.msra.mxu0 %v222
    %1283 = vmatprep.subr.bf16.mxu0 0
    %1284 = vmatpush1.bf16.msra.mxu0 %v221
    %1285 = vmatprep.subr.bf16.mxu0 0
    %1286 = vmatpush1.bf16.msra.mxu0 %v220
    %1287 = vmatprep.subr.bf16.mxu0 0
    %1288 = vmatpush1.bf16.msra.mxu0 %v219
    %1289 = vmatprep.subr.bf16.mxu0 0
    %1290 = vmatpush1.bf16.msra.mxu0 %v218
    %1291 = vmatprep.subr.bf16.mxu0 0
    %1292 = vmatpush1.bf16.msra.mxu0 %v217
    %1293 = vmatprep.subr.bf16.mxu0 0
    %1294 = vmatpush1.bf16.msra.mxu0 %v216
    %1295 = vmatprep.subr.bf16.mxu0 0
    %1296 = vmatpush2.bf16.msra.mxu0 %v231
    %1297 = vmatprep.subr.bf16.mxu0 0
    %1298 = vmatpush2.bf16.msra.mxu0 %v230
    %1299 = vmatprep.subr.bf16.mxu0 0
    %1300 = vmatpush2.bf16.msra.mxu0 %v229
    %1301 = vmatprep.subr.bf16.mxu0 0
    %1302 = vmatpush2.bf16.msra.mxu0 %v228
    %1303 = vmatprep.subr.bf16.mxu0 0
    %1304 = vmatpush2.bf16.msra.mxu0 %v227
    %1305 = vmatprep.subr.bf16.mxu0 0
    %1306 = vmatpush2.bf16.msra.mxu0 %v226
    %1307 = vmatprep.subr.bf16.mxu0 0
    %1308 = vmatpush2.bf16.msra.mxu0 %v225
    %1309 = vmatprep.subr.bf16.mxu0 0
    %1310 = vmatpush2.bf16.msra.mxu0 %v224
    %1311 = vmatprep.mubr.bf16.mxu0 %v1260
    %1312 = vmatmul.mubr.bf16.gmra.mxu0 %v1259
    %v1313 = vpop.f32.mrf.mxu0
    %v1314 = vadd.f32 0.0, %v1313
    %v1315 = vpop.f32.mrf.mxu0
    %v1316 = vpop.f32.mrf.mxu0
    %v1317 = vadd.f32 0.0, %v1316
    %v1318 = vpop.f32.mrf.mxu0
    %1319 = vmatprep.mubr.bf16.mxu0 %v1264
    %1320 = vmatmul.mubr.bf16.gmra.mxu0 %v1263
    %v1321 = vpop.f32.mrf.mxu0
    %v1322 = vadd.f32 0.0, %v1321
    %v1323 = vpop.f32.mrf.mxu0
    %v1324 = vpop.f32.mrf.mxu0
    %v1325 = vpop.f32.mrf.mxu0
    %1326 = vdwg.mxu0
    %1327 = vmatprep.subr.bf16.mxu0 0
    %1328 = vmatpush1.bf16.msra.mxu0 %v239
    %1329 = vmatprep.subr.bf16.mxu0 0
    %1330 = vmatpush1.bf16.msra.mxu0 %v238
    %1331 = vmatprep.subr.bf16.mxu0 0
    %1332 = vmatpush1.bf16.msra.mxu0 %v237
    %1333 = vmatprep.subr.bf16.mxu0 0
    %1334 = vmatpush1.bf16.msra.mxu0 %v236
    %1335 = vmatprep.subr.bf16.mxu0 0
    %1336 = vmatpush1.bf16.msra.mxu0 %v235
    %1337 = vmatprep.subr.bf16.mxu0 0
    %1338 = vmatpush1.bf16.msra.mxu0 %v234
    %1339 = vmatprep.subr.bf16.mxu0 0
    %1340 = vmatpush1.bf16.msra.mxu0 %v233
    %1341 = vmatprep.subr.bf16.mxu0 0
    %1342 = vmatpush1.bf16.msra.mxu0 %v232
    %1343 = vmatprep.subr.bf16.mxu0 0
    %1344 = vmatpush2.bf16.msra.mxu0 0
    %1345 = vmatprep.subr.bf16.mxu0 0
    %1346 = vmatpush2.bf16.msra.mxu0 0
    %1347 = vmatprep.subr.bf16.mxu0 0
    %1348 = vmatpush2.bf16.msra.mxu0 0
    %1349 = vmatprep.subr.bf16.mxu0 0
    %1350 = vmatpush2.bf16.msra.mxu0 0
    %1351 = vmatprep.subr.bf16.mxu0 0
    %1352 = vmatpush2.bf16.msra.mxu0 0
    %1353 = vmatprep.subr.bf16.mxu0 0
    %1354 = vmatpush2.bf16.msra.mxu0 %v242
    %1355 = vmatprep.subr.bf16.mxu0 0
    %1356 = vmatpush2.bf16.msra.mxu0 %v241
    %1357 = vmatprep.subr.bf16.mxu0 0
    %1358 = vmatpush2.bf16.msra.mxu0 %v240
    %1359 = vmatprep.mubr.bf16.mxu0 %v1274
    %1360 = vmatmul.mubr.bf16.gmra.mxu0 %v1261
    %v1361 = vpop.f32.mrf.mxu0
    %v1362 = vadd.f32 %v1314, %v1361
    %v1363 = vpop.f32.mrf.mxu0
    %v1364 = vpop.f32.mrf.mxu0
    %v1365 = vadd.f32 %v1317, %v1364
    %v1366 = vpop.f32.mrf.mxu0
    %1367 = vmatprep.mubr.bf16.mxu0 %v1277
    %1368 = vmatmul.mubr.bf16.gmra.mxu0 %v1265
    %v1369 = vpop.f32.mrf.mxu0
    %v1370 = vadd.f32 %v1322, %v1369
    %v1371 = vpop.f32.mrf.mxu0
    %v1372 = vpop.f32.mrf.mxu0
    %v1373 = vpop.f32.mrf.mxu0
    %1374 = vdwg.mxu0
    %v1375 = vmax.f32 %v1362, 0.0
    %v1376 = vmax.f32 %v1365, 0.0
    %v1377 = vmax.f32 %v1370, 0.0
    %v1378 = vpack.c.bf16 %v1376, %v1375
    %v1379 = vpack.c.bf16 %v1377, %v1377
    %s1380 = scalar_lea.vmem %s2, 192
    %v1381 = vld [vmem:[%s1380] sm:$0xf]
    %v1382 = vld [vmem:[%s1380 + $0x4] sm:$0xf]
    %v1383 = vld [vmem:[%s1380 + $0x8] sm:$0xf]
    %v1384 = vld [vmem:[%s1380 + $0xc] sm:$0xf]
    %v1385 = vld [vmem:[%s1380 + $0x10] sm:$0xf]
    %v1386 = vld [vmem:[%s1380 + $0x14] sm:$0xf]
    %v1387 = vld [vmem:[%s1380 + $0x18] sm:$0xf]
    %v1388 = vld [vmem:[%s1380 + $0x1c] sm:$0xf]
    %v1389 = vld [vmem:[%s1380 + $0x20] sm:$0xf]
    %v1390 = vld [vmem:[%s1380 + $0x24] sm:$0xf]
    %v1391 = vld [vmem:[%s1380 + $0x28] sm:$0xf]
    %v1392 = vld [vmem:[%s1380 + $0x2c] sm:$0xf]
    %v1405 = vunpack.c.l.b16 %v1381
    %v1406 = vunpack.c.l.b16 %v1382
    %v1407 = vunpack.c.l.b16 %v1383
    %v1408 = vunpack.c.l.b16 %v1384
    %v1409 = vunpack.c.l.b16 %v1385
    %v1410 = vunpack.c.l.b16 %v1386
    %v1411 = vunpack.c.l.b16 %v1387
    %v1412 = vunpack.c.l.b16 %v1388
    %v1413 = vunpack.c.l.b16 %v1389
    %v1414 = vunpack.c.l.b16 %v1390
    %v1415 = vunpack.c.l.b16 %v1391
    %v1416 = vunpack.c.l.b16 %v1392
    %v1417 = vpack.c.b16 %v1406, %v1405
    %v1418 = vpack.c.b16 %v1408, %v1407
    %v1419 = vpack.c.b16 %v1410, %v1409
    %v1420 = vpack.c.b16 %v1412, %v1411
    %v1421 = vpack.c.b16 %v1414, %v1413
    %v1422 = vpack.c.b16 %v1416, %v1415
    %v1430 = vsel %vm585, %v1378, 0
    %v1433 = vsel %vm585, %v1379, 0
    %1435 = vmatprep.subr.bf16.mxu0 0
    %1436 = vmatpush1.bf16.msra.mxu0 0
    %1437 = vmatprep.subr.bf16.mxu0 0
    %1438 = vmatpush1.bf16.msra.mxu0 0
    %1439 = vmatprep.subr.bf16.mxu0 0
    %1440 = vmatpush1.bf16.msra.mxu0 %v1422
    %1441 = vmatprep.subr.bf16.mxu0 0
    %1442 = vmatpush1.bf16.msra.mxu0 %v1421
    %1443 = vmatprep.subr.bf16.mxu0 0
    %1444 = vmatpush1.bf16.msra.mxu0 %v1420
    %1445 = vmatprep.subr.bf16.mxu0 0
    %1446 = vmatpush1.bf16.msra.mxu0 %v1419
    %1447 = vmatprep.subr.bf16.mxu0 0
    %1448 = vmatpush1.bf16.msra.mxu0 %v1418
    %1449 = vmatprep.subr.bf16.mxu0 0
    %1450 = vmatpush1.bf16.msra.mxu0 %v1417
    %1451 = vmatprep.subr.bf16.mxu0 0
    %1452 = vmatpush2.bf16.msra.mxu0 0
    %1453 = vmatprep.subr.bf16.mxu0 0
    %1454 = vmatpush2.bf16.msra.mxu0 0
    %1455 = vmatprep.subr.bf16.mxu0 0
    %1456 = vmatpush2.bf16.msra.mxu0 0
    %1457 = vmatprep.subr.bf16.mxu0 0
    %1458 = vmatpush2.bf16.msra.mxu0 0
    %1459 = vmatprep.subr.bf16.mxu0 0
    %1460 = vmatpush2.bf16.msra.mxu0 0
    %1461 = vmatprep.subr.bf16.mxu0 0
    %1462 = vmatpush2.bf16.msra.mxu0 0
    %1463 = vmatprep.subr.bf16.mxu0 0
    %1464 = vmatpush2.bf16.msra.mxu0 0
    %1465 = vmatprep.subr.bf16.mxu0 0
    %1466 = vmatpush2.bf16.msra.mxu0 0
    %1467 = vmatprep.mubr.bf16.mxu0 0
    %1468 = vmatmul.mubr.bf16.gmra.mxu0 %v1430
    %v1469 = vpop.f32.mrf.mxu0
    %v1470 = vadd.f32 0.0, %v1469
    %v1471 = vpop.f32.mrf.mxu0
    %v1472 = vpop.f32.mrf.mxu0
    %v1473 = vadd.f32 0.0, %v1472
    %v1474 = vpop.f32.mrf.mxu0
    %1475 = vmatprep.mubr.bf16.mxu0 0
    %1476 = vmatmul.mubr.bf16.gmra.mxu0 %v1433
    %v1477 = vpop.f32.mrf.mxu0
    %v1478 = vadd.f32 0.0, %v1477
    %v1479 = vpop.f32.mrf.mxu0
    %v1480 = vpop.f32.mrf.mxu0
    %v1481 = vpop.f32.mrf.mxu0
    %1482 = vdwg.mxu0
    %v1483 = vadd.f32 %v1231, %v1470
    %v1484 = vadd.f32 %v1232, %v1473
    %v1485 = vadd.f32 %v1233, %v1478
    %s1486 = scalar_lea.vmem %s0, 240
    %v1487 = vld [vmem:[%s1486] sm:$0xff]
    %v1488 = vld [vmem:[%s1486 + $0x8] sm:$0xff]
    %v1489 = vld [vmem:[%s1486 + $0x10] sm:$0xff]
    %v1490 = vld [vmem:[%s1486 + $0x18] sm:$0xff]
    %v1491 = vld [vmem:[%s1486 + $0x20] sm:$0xff]
    %v1492 = vld [vmem:[%s1486 + $0x28] sm:$0xff]
    %v1499 = vunpack.c.l.b16 %v1487
    %v1500 = vunpack.c.h.b16 %v1487
    %v1501 = vunpack.c.l.b16 %v1488
    %v1502 = vunpack.c.h.b16 %v1488
    %v1503 = vunpack.c.l.b16 %v1489
    %v1504 = vunpack.c.h.b16 %v1489
    %v1505 = vunpack.c.l.b16 %v1490
    %v1506 = vunpack.c.h.b16 %v1490
    %v1507 = vunpack.c.l.b16 %v1491
    %v1508 = vunpack.c.h.b16 %v1491
    %v1509 = vunpack.c.l.b16 %v1492
    %v1510 = vunpack.c.h.b16 %v1492
    %v1511 = vpack.c.b16 %v1503, %v1499
    %v1512 = vpack.c.b16 %v1504, %v1500
    %v1513 = vpack.c.b16 %v1505, %v1501
    %v1514 = vpack.c.b16 %v1506, %v1502
    %v1515 = vpack.c.b16 %v1507, %v1507
    %v1516 = vpack.c.b16 %v1508, %v1508
    %v1517 = vpack.c.b16 %v1509, %v1509
    %v1518 = vpack.c.b16 %v1510, %v1510
    %v1526 = vsel %vm270, %v1514, 0
    %v1529 = vsel %vm270, %v1518, 0
    %1531 = vmatprep.subr.bf16.mxu0 0
    %1532 = vmatpush1.bf16.msra.mxu0 %v223
    %1533 = vmatprep.subr.bf16.mxu0 0
    %1534 = vmatpush1.bf16.msra.mxu0 %v222
    %1535 = vmatprep.subr.bf16.mxu0 0
    %1536 = vmatpush1.bf16.msra.mxu0 %v221
    %1537 = vmatprep.subr.bf16.mxu0 0
    %1538 = vmatpush1.bf16.msra.mxu0 %v220
    %1539 = vmatprep.subr.bf16.mxu0 0
    %1540 = vmatpush1.bf16.msra.mxu0 %v219
    %1541 = vmatprep.subr.bf16.mxu0 0
    %1542 = vmatpush1.bf16.msra.mxu0 %v218
    %1543 = vmatprep.subr.bf16.mxu0 0
    %1544 = vmatpush1.bf16.msra.mxu0 %v217
    %1545 = vmatprep.subr.bf16.mxu0 0
    %1546 = vmatpush1.bf16.msra.mxu0 %v216
    %1547 = vmatprep.subr.bf16.mxu0 0
    %1548 = vmatpush2.bf16.msra.mxu0 %v231
    %1549 = vmatprep.subr.bf16.mxu0 0
    %1550 = vmatpush2.bf16.msra.mxu0 %v230
    %1551 = vmatprep.subr.bf16.mxu0 0
    %1552 = vmatpush2.bf16.msra.mxu0 %v229
    %1553 = vmatprep.subr.bf16.mxu0 0
    %1554 = vmatpush2.bf16.msra.mxu0 %v228
    %1555 = vmatprep.subr.bf16.mxu0 0
    %1556 = vmatpush2.bf16.msra.mxu0 %v227
    %1557 = vmatprep.subr.bf16.mxu0 0
    %1558 = vmatpush2.bf16.msra.mxu0 %v226
    %1559 = vmatprep.subr.bf16.mxu0 0
    %1560 = vmatpush2.bf16.msra.mxu0 %v225
    %1561 = vmatprep.subr.bf16.mxu0 0
    %1562 = vmatpush2.bf16.msra.mxu0 %v224
    %1563 = vmatprep.mubr.bf16.mxu0 %v1512
    %1564 = vmatmul.mubr.bf16.gmra.mxu0 %v1511
    %v1565 = vpop.f32.mrf.mxu0
    %v1566 = vadd.f32 0.0, %v1565
    %v1567 = vpop.f32.mrf.mxu0
    %v1568 = vpop.f32.mrf.mxu0
    %v1569 = vadd.f32 0.0, %v1568
    %v1570 = vpop.f32.mrf.mxu0
    %1571 = vmatprep.mubr.bf16.mxu0 %v1516
    %1572 = vmatmul.mubr.bf16.gmra.mxu0 %v1515
    %v1573 = vpop.f32.mrf.mxu0
    %v1574 = vadd.f32 0.0, %v1573
    %v1575 = vpop.f32.mrf.mxu0
    %v1576 = vpop.f32.mrf.mxu0
    %v1577 = vpop.f32.mrf.mxu0
    %1578 = vdwg.mxu0
    %1579 = vmatprep.subr.bf16.mxu0 0
    %1580 = vmatpush1.bf16.msra.mxu0 %v239
    %1581 = vmatprep.subr.bf16.mxu0 0
    %1582 = vmatpush1.bf16.msra.mxu0 %v238
    %1583 = vmatprep.subr.bf16.mxu0 0
    %1584 = vmatpush1.bf16.msra.mxu0 %v237
    %1585 = vmatprep.subr.bf16.mxu0 0
    %1586 = vmatpush1.bf16.msra.mxu0 %v236
    %1587 = vmatprep.subr.bf16.mxu0 0
    %1588 = vmatpush1.bf16.msra.mxu0 %v235
    %1589 = vmatprep.subr.bf16.mxu0 0
    %1590 = vmatpush1.bf16.msra.mxu0 %v234
    %1591 = vmatprep.subr.bf16.mxu0 0
    %1592 = vmatpush1.bf16.msra.mxu0 %v233
    %1593 = vmatprep.subr.bf16.mxu0 0
    %1594 = vmatpush1.bf16.msra.mxu0 %v232
    %1595 = vmatprep.subr.bf16.mxu0 0
    %1596 = vmatpush2.bf16.msra.mxu0 0
    %1597 = vmatprep.subr.bf16.mxu0 0
    %1598 = vmatpush2.bf16.msra.mxu0 0
    %1599 = vmatprep.subr.bf16.mxu0 0
    %1600 = vmatpush2.bf16.msra.mxu0 0
    %1601 = vmatprep.subr.bf16.mxu0 0
    %1602 = vmatpush2.bf16.msra.mxu0 0
    %1603 = vmatprep.subr.bf16.mxu0 0
    %1604 = vmatpush2.bf16.msra.mxu0 0
    %1605 = vmatprep.subr.bf16.mxu0 0
    %1606 = vmatpush2.bf16.msra.mxu0 %v242
    %1607 = vmatprep.subr.bf16.mxu0 0
    %1608 = vmatpush2.bf16.msra.mxu0 %v241
    %1609 = vmatprep.subr.bf16.mxu0 0
    %1610 = vmatpush2.bf16.msra.mxu0 %v240
    %1611 = vmatprep.mubr.bf16.mxu0 %v1526
    %1612 = vmatmul.mubr.bf16.gmra.mxu0 %v1513
    %v1613 = vpop.f32.mrf.mxu0
    %v1614 = vadd.f32 %v1566, %v1613
    %v1615 = vpop.f32.mrf.mxu0
    %v1616 = vpop.f32.mrf.mxu0
    %v1617 = vadd.f32 %v1569, %v1616
    %v1618 = vpop.f32.mrf.mxu0
    %1619 = vmatprep.mubr.bf16.mxu0 %v1529
    %1620 = vmatmul.mubr.bf16.gmra.mxu0 %v1517
    %v1621 = vpop.f32.mrf.mxu0
    %v1622 = vadd.f32 %v1574, %v1621
    %v1623 = vpop.f32.mrf.mxu0
    %v1624 = vpop.f32.mrf.mxu0
    %v1625 = vpop.f32.mrf.mxu0
    %1626 = vdwg.mxu0
    %v1627 = vmax.f32 %v1614, 0.0
    %v1628 = vmax.f32 %v1617, 0.0
    %v1629 = vmax.f32 %v1622, 0.0
    %v1630 = vpack.c.bf16 %v1628, %v1627
    %v1631 = vpack.c.bf16 %v1629, %v1629
    %s1632 = scalar_lea.vmem %s2, 240
    %v1633 = vld [vmem:[%s1632] sm:$0xf]
    %v1634 = vld [vmem:[%s1632 + $0x4] sm:$0xf]
    %v1635 = vld [vmem:[%s1632 + $0x8] sm:$0xf]
    %v1636 = vld [vmem:[%s1632 + $0xc] sm:$0xf]
    %v1637 = vld [vmem:[%s1632 + $0x10] sm:$0xf]
    %v1638 = vld [vmem:[%s1632 + $0x14] sm:$0xf]
    %v1639 = vld [vmem:[%s1632 + $0x18] sm:$0xf]
    %v1640 = vld [vmem:[%s1632 + $0x1c] sm:$0xf]
    %v1641 = vld [vmem:[%s1632 + $0x20] sm:$0xf]
    %v1642 = vld [vmem:[%s1632 + $0x24] sm:$0xf]
    %v1643 = vld [vmem:[%s1632 + $0x28] sm:$0xf]
    %v1644 = vld [vmem:[%s1632 + $0x2c] sm:$0xf]
    %v1657 = vunpack.c.l.b16 %v1633
    %v1658 = vunpack.c.l.b16 %v1634
    %v1659 = vunpack.c.l.b16 %v1635
    %v1660 = vunpack.c.l.b16 %v1636
    %v1661 = vunpack.c.l.b16 %v1637
    %v1662 = vunpack.c.l.b16 %v1638
    %v1663 = vunpack.c.l.b16 %v1639
    %v1664 = vunpack.c.l.b16 %v1640
    %v1665 = vunpack.c.l.b16 %v1641
    %v1666 = vunpack.c.l.b16 %v1642
    %v1667 = vunpack.c.l.b16 %v1643
    %v1668 = vunpack.c.l.b16 %v1644
    %v1669 = vpack.c.b16 %v1658, %v1657
    %v1670 = vpack.c.b16 %v1660, %v1659
    %v1671 = vpack.c.b16 %v1662, %v1661
    %v1672 = vpack.c.b16 %v1664, %v1663
    %v1673 = vpack.c.b16 %v1666, %v1665
    %v1674 = vpack.c.b16 %v1668, %v1667
    %v1682 = vsel %vm585, %v1630, 0
    %v1685 = vsel %vm585, %v1631, 0
    %1687 = vmatprep.subr.bf16.mxu0 0
    %1688 = vmatpush1.bf16.msra.mxu0 0
    %1689 = vmatprep.subr.bf16.mxu0 0
    %1690 = vmatpush1.bf16.msra.mxu0 0
    %1691 = vmatprep.subr.bf16.mxu0 0
    %1692 = vmatpush1.bf16.msra.mxu0 %v1674
    %1693 = vmatprep.subr.bf16.mxu0 0
    %1694 = vmatpush1.bf16.msra.mxu0 %v1673
    %1695 = vmatprep.subr.bf16.mxu0 0
    %1696 = vmatpush1.bf16.msra.mxu0 %v1672
    %1697 = vmatprep.subr.bf16.mxu0 0
    %1698 = vmatpush1.bf16.msra.mxu0 %v1671
    %1699 = vmatprep.subr.bf16.mxu0 0
    %1700 = vmatpush1.bf16.msra.mxu0 %v1670
    %1701 = vmatprep.subr.bf16.mxu0 0
    %1702 = vmatpush1.bf16.msra.mxu0 %v1669
    %1703 = vmatprep.subr.bf16.mxu0 0
    %1704 = vmatpush2.bf16.msra.mxu0 0
    %1705 = vmatprep.subr.bf16.mxu0 0
    %1706 = vmatpush2.bf16.msra.mxu0 0
    %1707 = vmatprep.subr.bf16.mxu0 0
    %1708 = vmatpush2.bf16.msra.mxu0 0
    %1709 = vmatprep.subr.bf16.mxu0 0
    %1710 = vmatpush2.bf16.msra.mxu0 0
    %1711 = vmatprep.subr.bf16.mxu0 0
    %1712 = vmatpush2.bf16.msra.mxu0 0
    %1713 = vmatprep.subr.bf16.mxu0 0
    %1714 = vmatpush2.bf16.msra.mxu0 0
    %1715 = vmatprep.subr.bf16.mxu0 0
    %1716 = vmatpush2.bf16.msra.mxu0 0
    %1717 = vmatprep.subr.bf16.mxu0 0
    %1718 = vmatpush2.bf16.msra.mxu0 0
    %1719 = vmatprep.mubr.bf16.mxu0 0
    %1720 = vmatmul.mubr.bf16.gmra.mxu0 %v1682
    %v1721 = vpop.f32.mrf.mxu0
    %v1722 = vadd.f32 0.0, %v1721
    %v1723 = vpop.f32.mrf.mxu0
    %v1724 = vpop.f32.mrf.mxu0
    %v1725 = vadd.f32 0.0, %v1724
    %v1726 = vpop.f32.mrf.mxu0
    %1727 = vmatprep.mubr.bf16.mxu0 0
    %1728 = vmatmul.mubr.bf16.gmra.mxu0 %v1685
    %v1729 = vpop.f32.mrf.mxu0
    %v1730 = vadd.f32 0.0, %v1729
    %v1731 = vpop.f32.mrf.mxu0
    %v1732 = vpop.f32.mrf.mxu0
    %v1733 = vpop.f32.mrf.mxu0
    %1734 = vdwg.mxu0
    %v1735 = vadd.f32 %v1483, %v1722
    %v1736 = vadd.f32 %v1484, %v1725
    %v1737 = vadd.f32 %v1485, %v1730
    %vm1738 = vcmask 261120
    %1739 = vst.msk [vmem:[#allocation2] sm:$0xff] %vm1738, %v1735
    %1740 = vst.msk [vmem:[#allocation2 + $0x8] sm:$0xff] %vm1738, %v1736
    %1741 = vst.msk [vmem:[#allocation2 + $0x10] sm:$0xff] %vm1738, %v1737
    // Predicated region
    $region14: #{dnn_forward_batched.1} parent=1 // pred_check
      _
    $region15: #{dnn_forward_batched.1} parent=1 // pred_check_branch
      %1743 = sbr.rel (0) target = $region17
    $region16: #{dnn_forward_batched.1} parent=1 // pred_region
      %s1745 = ssub.s32 384, 384
      %1746 = vsyncadd [#allocation3], %s1745
      %s1747 = sshll.u32 [#allocation2], 4
      %s1748 = int_to_ptr.vmem [resolvable:$true] %s1747
      %1753 = dma.vmem_to_hbm [thread:$0]  %s1748, 384, %s3, [#allocation3], 128, 128, 8
    $region17: #{dnn_forward_batched.1} parent=1 // pred_fallthru
      _
    // Predicated region
    $region18: #{dnn_forward_batched.1} parent=1 // pred_check
      _
    $region19: #{dnn_forward_batched.1} parent=1 // pred_check_branch
      %1755 = sbr.rel (0) target = $region21
    $region20: #{dnn_forward_batched.1} parent=1 // pred_region
      %1756 = dma.done [#allocation3], 384
    $region21: #{dnn_forward_batched.1} parent=1 // pred_fallthru
      _
    %1757 = vsyncpa [#allocation3], 1

</llo_original>
